<compile_context>
chip_gen: v7x
topology: tpu7x:2x2x1
jax: 0.10.0
libtpu: 0.0.40
codegen_flags: <defaults>
</compile_context>

<pallas_src>
import functools

import jax
import jax.numpy as jnp
from jax.experimental import pallas as pl
from jax.experimental.pallas import tpu as pltpu

# Small compatibility hedges (new names per current JAX; old names as fallback).
_CompilerParams = getattr(pltpu, "CompilerParams", None) or getattr(pltpu, "TPUCompilerParams")
_MemorySpace = getattr(pltpu, "MemorySpace", None) or getattr(pltpu, "TPUMemorySpace")


# ----------------------------------------------------------------------------
# Fused decoder kernel (one grid program per batch element)
# ----------------------------------------------------------------------------
def _fused_decoder_kernel(*refs, seq_len, feat_dim, trend_poly, latent_dim, chans):
    n_conv = len(chans) - 1
    (zs_ref, z_ref, wz_ref, bz_ref, lw2_ref, lb2_ref,
     tw2_ref, tb2_ref, poly_ref, wr_ref, rb_ref) = refs[:11]
    conv_refs = refs[11:11 + 2 * n_conv]
    o_ref = refs[11 + 2 * n_conv]

    f32 = jnp.float32
    F, P, S, Z = feat_dim, trend_poly, seq_len, latent_dim
    b_idx = pl.program_id(0)

    z = z_ref[0]                                                    # (1, Z) in VMEM

    # ---- packed head matmul: [level_dense1 | trend_dense1] (lane-packed) ----
    hp = jnp.dot(z, wz_ref[...], preferred_element_type=f32) + bz_ref[...]
    lvl_h = jnp.maximum(hp[:, :F], 0.0)                             # (1, F)
    trd_h = jnp.maximum(hp[:, F:F + F * P], 0.0)                    # (1, F*P)

    # ---- level branch: second dense; broadcast over seq at the final combine ----
    lvl = jnp.dot(lvl_h, lw2_ref[...], preferred_element_type=f32) + lb2_ref[...]   # (1, F)

    # ---- trend branch: dense2 (columns pre-permuted to p-major) + VPU poly FMA ----
    tpv = jnp.dot(trd_h, tw2_ref[...], preferred_element_type=f32) + tb2_ref[...]   # (1, P*F)
    poly = poly_ref[...]                                            # (S, P), poly[s,p] = (s/S)^(p+1)
    trend = jnp.zeros((S, F), f32)
    for p in range(P):
        trend = trend + poly[:, p:p + 1] * tpv[:, p * F:(p + 1) * F]

    # ---- residual branch: res[s,f] = sum_k z[k] * Wr[k,s,f] + br[s,f] (VPU FMA) ----
    res = rb_ref[...]                                               # (S, F)
    for k in range(Z):
        res = res + zs_ref[b_idx, k] * wr_ref[k]                    # scalar * (S, F)

    # ---- decoder conv stack: k=3 / stride=1 / pad=1 as shifted dot-accumulations ----
    ri = jax.lax.broadcasted_iota(jnp.int32, (S, S), 0)
    ci = jax.lax.broadcasted_iota(jnp.int32, (S, S), 1)
    sh_down = (ri == ci + 1).astype(f32)    # (sh_down @ x)[l] = x[l-1], row 0   -> 0
    sh_up = (ri + 1 == ci).astype(f32)      # (sh_up   @ x)[l] = x[l+1], row S-1 -> 0

    h = jnp.broadcast_to(z, (S, Z))         # z.unsqueeze(2).expand(-1,-1,seq_len), channel-last
    for layer in range(n_conv):
        c_in = chans[layer]
        wm = conv_refs[2 * layer][...]      # (3*c_in, c_out); rows [j*c_in:(j+1)*c_in] = tap j
        bb = conv_refs[2 * layer + 1][...]  # (1, c_out)
        h_dn = jnp.dot(sh_down, h, preferred_element_type=f32)
        h_up = jnp.dot(sh_up, h, preferred_element_type=f32)
        acc = jnp.dot(h_dn, wm[0 * c_in:1 * c_in], preferred_element_type=f32)
        acc = acc + jnp.dot(h, wm[1 * c_in:2 * c_in], preferred_element_type=f32)
        acc = acc + jnp.dot(h_up, wm[2 * c_in:3 * c_in], preferred_element_type=f32)
        acc = acc + bb
        if layer < n_conv - 1:
            acc = jnp.maximum(acc, 0.0)
        h = acc
    x_hat = h                                                       # (S, F)

    # ---- combine: x_hat + level (broadcast over seq) + trend + residual ----
    o_ref[0] = (x_hat + trend + res + lvl).astype(o_ref.dtype)


# ----------------------------------------------------------------------------
# One-time parameter preparation (all packing/transposes hoisted out of hot path)
# ----------------------------------------------------------------------------
def prepare_params(p, cfg):
    seq_len, feat_dim, hidden, latent_dim, P = cfg
    F = feat_dim
    # Pack the two z-heads into one matmul: [level_dense1 | trend_dense1].
    wz = jnp.concatenate([p["lvl_w1"], p["trend_w1"]], axis=1)
    bz = jnp.concatenate([p["lvl_b1"], p["trend_b1"]]).reshape(1, -1)
    # Permute trend_dense2 output columns to p-major order: new[p*F+f] = old[f*P+p].
    perm = jnp.array([f * P + pp for pp in range(P) for f in range(F)], dtype=jnp.int32)
    tw2p = p["trend_w2"][:, perm]
    tb2p = p["trend_b2"][perm].reshape(1, -1)
    # Poly table (S, P): poly[s, p] = (s / S)^(p+1).
    lin = jnp.arange(seq_len, dtype=jnp.float32) / seq_len
    poly = jnp.stack([lin ** (pp + 1) for pp in range(P)], axis=1)
    # Residual weight reshaped so the kernel accumulates directly in (S, F) layout.
    wr3 = p["res_w"].reshape(latent_dim, seq_len, feat_dim)
    rb2 = p["res_b"].reshape(seq_len, feat_dim)
    # Conv weights as (3*C_in, C_out): wm[j*C_in + c, co] = W[co, c, j].
    conv_wms, conv_bs = [], []
    for (w, b) in p["convs"]:
        co, ci, ks = w.shape
        conv_wms.append(jnp.transpose(w, (2, 1, 0)).reshape(ks * ci, co))
        conv_bs.append(b.reshape(1, co))
    return dict(wz=wz, bz=bz, lw2=p["lvl_w2"], lb2=p["lvl_b2"].reshape(1, -1),
                tw2p=tw2p, tb2p=tb2p, poly=poly, wr3=wr3, rb2=rb2,
                conv_wms=conv_wms, conv_bs=conv_bs)


# ----------------------------------------------------------------------------
# Forward wrapper: single fused pallas_call, grid over batch ("parallel")
# ----------------------------------------------------------------------------
@functools.partial(jax.jit, static_argnums=(2,))
def trend_vae_decoder_forward(prep, z, cfg):
    seq_len, feat_dim, hidden, latent_dim, P = cfg
    chans = (latent_dim,) + tuple(hidden[::-1]) + (feat_dim,)
    B = z.shape[0]
    z = z.astype(jnp.float32)
    z3 = z.reshape(B, 1, latent_dim)

    inputs = [z, z3, prep["wz"], prep["bz"], prep["lw2"], prep["lb2"],
              prep["tw2p"], prep["tb2p"], prep["poly"], prep["wr3"], prep["rb2"]]
    for wm, b in zip(prep["conv_wms"], prep["conv_bs"]):
        inputs += [wm, b]

    def whole(a):
        zero_idx = (0,) * a.ndim
        return pl.BlockSpec(a.shape, lambda b, _z=zero_idx: _z)

    in_specs = [pl.BlockSpec(memory_space=_MemorySpace.SMEM),            # z scalars (B, Z)
                pl.BlockSpec((1, 1, latent_dim), lambda b: (b, 0, 0))]   # z rows for matmuls
    in_specs += [whole(a) for a in inputs[2:]]                           # weights: full-array blocks

    kernel = functools.partial(_fused_decoder_kernel, seq_len=seq_len,
                               feat_dim=feat_dim, trend_poly=P,
                               latent_dim=latent_dim, chans=chans)

    return pl.pallas_call(
        kernel,
        out_shape=jax.ShapeDtypeStruct((B, seq_len, feat_dim), jnp.float32),
        grid=(B,),
        in_specs=in_specs,
        out_specs=pl.BlockSpec((1, seq_len, feat_dim), lambda b: (b, 0, 0)),
        compiler_params=_CompilerParams(dimension_semantics=("parallel",)),
    )(*inputs)


# ----------------------------------------------------------------------------
# Pure-JAX reference (same parameters) for a tight correctness check
# ----------------------------------------------------------------------------
def ref_decoder_forward(params, z, cfg):
    seq_len, feat_dim, hidden, latent_dim, P = cfg
    B = z.shape[0]
    lv = jnp.maximum(z @ params["lvl_w1"] + params["lvl_b1"], 0.0)
    lv = lv @ params["lvl_w2"] + params["lvl_b2"]
    level = jnp.broadcast_to(lv[:, None, :], (B, seq_len, feat_dim))
    tp = jnp.maximum(z @ params["trend_w1"] + params["trend_b1"], 0.0)
    tp = (tp @ params["trend_w2"] + params["trend_b2"]).reshape(B, feat_dim, P)
    lin = jnp.arange(seq_len, dtype=jnp.float32) / seq_len
    poly = jnp.stack([lin ** (pp + 1) for pp in range(P)], axis=0)       # (P, S)
    trend = jnp.einsum("bfp,ps->bsf", tp, poly)
    res = (z @ params["res_w"] + params["res_b"]).reshape(B, seq_len, feat_dim)
    h = jnp.broadcast_to(z[:, :, None], (B, latent_dim, seq_len))        # NCW
    convs = params["convs"]
    for idx, (w, b) in enumerate(convs):
        h = jax.lax.conv_general_dilated(
            h, w, window_strides=(1,), padding=((1, 1),),
            dimension_numbers=("NCH", "OIH", "NCH")) + b[None, :, None]
        if idx < len(convs) - 1:
            h = jnp.maximum(h, 0.0)
    x_hat = jnp.transpose(h, (0, 2, 1))
    return x_hat + level + trend + res


# ----------------------------------------------------------------------------
# Deterministic parameter init (PyTorch default uniform; linears stored (in, out))
# ----------------------------------------------------------------------------
def init_params(key, cfg):
    seq_len, feat_dim, hidden, latent_dim, P = cfg

    def lin_init(k, fi, fo):
        k1, k2 = jax.random.split(k)
        bd = 1.0 / float(fi) ** 0.5
        return (jax.random.uniform(k1, (fi, fo), jnp.float32, -bd, bd),
                jax.random.uniform(k2, (fo,), jnp.float32, -bd, bd))

    def conv_init(k, ci, co, ks=3):
        k1, k2 = jax.random.split(k)
        bd = 1.0 / float(ci * ks) ** 0.5
        return (jax.random.uniform(k1, (co, ci, ks), jnp.float32, -bd, bd),
                jax.random.uniform(k2, (co,), jnp.float32, -bd, bd))

    chans = [latent_dim] + list(hidden[::-1]) + [feat_dim]
    keys = jax.random.split(key, 5 + len(chans) - 1)
    p = {}
    p["lvl_w1"], p["lvl_b1"] = lin_init(keys[0], latent_dim, feat_dim)
    p["lvl_w2"], p["lvl_b2"] = lin_init(keys[1], feat_dim, feat_dim)
    p["trend_w1"], p["trend_b1"] = lin_init(keys[2], latent_dim, feat_dim * P)
    p["trend_w2"], p["trend_b2"] = lin_init(keys[3], feat_dim * P, feat_dim * P)
    p["res_w"], p["res_b"] = lin_init(keys[4], latent_dim, seq_len * feat_dim)
    p["convs"] = [conv_init(keys[5 + i], chans[i], chans[i + 1])
                  for i in range(len(chans) - 1)]
    return p


if __name__ == "__main__":
    # Small config consistent with the module:
    #   TrendVAEDecoder(seq_len=16, feat_dim=4, hidden_layer_sizes=[32, 16],
    #                   latent_dim=8, trend_poly=2, use_residual_conn=True)
    B = 2
    seq_len, feat_dim = 16, 4
    hidden = (32, 16)
    latent_dim, trend_poly = 8, 2
    cfg = (seq_len, feat_dim, hidden, latent_dim, trend_poly)

    root = jax.random.PRNGKey(0)
    k_param, k_z = jax.random.split(root)
    params = init_params(k_param, cfg)
    z = jax.random.normal(k_z, (B, latent_dim), dtype=jnp.float32)

    prep = prepare_params(params, cfg)
    out = trend_vae_decoder_forward(prep, z, cfg)
    jax.block_until_ready(out)

    with jax.default_matmul_precision("highest"):
        ref = ref_decoder_forward(params, z, cfg)

    if not bool(jnp.allclose(out, ref, atol=1e-4, rtol=1e-3)):
        err = float(jnp.max(jnp.abs(out - ref)))
        raise RuntimeError(f"Pallas output does not match JAX reference (max abs err {err:.3e})")
    print("KERNEL_OK")
</pallas_src>

<mosaic_0001>
module attributes {stable_mosaic.version = 11 : i64} {
  func.func @_fused_decoder_kernel(%arg0: i32, %arg1: memref<2x8xf32, #tpu.memory_space<smem>>, %arg2: memref<1x1x8xf32, #tpu.memory_space<vmem>>, %arg3: memref<8x12xf32, #tpu.memory_space<vmem>>, %arg4: memref<1x12xf32, #tpu.memory_space<vmem>>, %arg5: memref<4x4xf32, #tpu.memory_space<vmem>>, %arg6: memref<1x4xf32, #tpu.memory_space<vmem>>, %arg7: memref<8x8xf32, #tpu.memory_space<vmem>>, %arg8: memref<1x8xf32, #tpu.memory_space<vmem>>, %arg9: memref<16x2xf32, #tpu.memory_space<vmem>>, %arg10: memref<8x16x4xf32, #tpu.memory_space<vmem>>, %arg11: memref<16x4xf32, #tpu.memory_space<vmem>>, %arg12: memref<24x16xf32, #tpu.memory_space<vmem>>, %arg13: memref<1x16xf32, #tpu.memory_space<vmem>>, %arg14: memref<48x32xf32, #tpu.memory_space<vmem>>, %arg15: memref<1x32xf32, #tpu.memory_space<vmem>>, %arg16: memref<96x4xf32, #tpu.memory_space<vmem>>, %arg17: memref<1x4xf32, #tpu.memory_space<vmem>>, %arg18: memref<1x16x4xf32, #tpu.memory_space<vmem>>) attributes {dimension_semantics = [#tpu.dimension_semantics<parallel>], iteration_bounds = array<i64: 2>, scalar_prefetch = 0 : i64, scratch_operands = 0 : i64, tpu.core_type = #tpu.core_type<tc>, window_params = [{transform_indices = @transform_0, window_bounds = array<i64: 2, 8>}, {transform_indices = @transform_1, window_bounds = array<i64: 1, 1, 8>}, {pipeline_mode = #tpu.pipeline_mode<synchronous>, transform_indices = @transform_2, window_bounds = array<i64: 8, 12>}, {pipeline_mode = #tpu.pipeline_mode<synchronous>, transform_indices = @transform_3, window_bounds = array<i64: 1, 12>}, {pipeline_mode = #tpu.pipeline_mode<synchronous>, transform_indices = @transform_4, window_bounds = array<i64: 4, 4>}, {pipeline_mode = #tpu.pipeline_mode<synchronous>, transform_indices = @transform_5, window_bounds = array<i64: 1, 4>}, {pipeline_mode = #tpu.pipeline_mode<synchronous>, transform_indices = @transform_6, window_bounds = array<i64: 8, 8>}, {pipeline_mode = #tpu.pipeline_mode<synchronous>, transform_indices = @transform_7, window_bounds = array<i64: 1, 8>}, {pipeline_mode = #tpu.pipeline_mode<synchronous>, transform_indices = @transform_8, window_bounds = array<i64: 16, 2>}, {pipeline_mode = #tpu.pipeline_mode<synchronous>, transform_indices = @transform_9, window_bounds = array<i64: 8, 16, 4>}, {pipeline_mode = #tpu.pipeline_mode<synchronous>, transform_indices = @transform_10, window_bounds = array<i64: 16, 4>}, {pipeline_mode = #tpu.pipeline_mode<synchronous>, transform_indices = @transform_11, window_bounds = array<i64: 24, 16>}, {pipeline_mode = #tpu.pipeline_mode<synchronous>, transform_indices = @transform_12, window_bounds = array<i64: 1, 16>}, {pipeline_mode = #tpu.pipeline_mode<synchronous>, transform_indices = @transform_13, window_bounds = array<i64: 48, 32>}, {pipeline_mode = #tpu.pipeline_mode<synchronous>, transform_indices = @transform_14, window_bounds = array<i64: 1, 32>}, {pipeline_mode = #tpu.pipeline_mode<synchronous>, transform_indices = @transform_15, window_bounds = array<i64: 96, 4>}, {pipeline_mode = #tpu.pipeline_mode<synchronous>, transform_indices = @transform_16, window_bounds = array<i64: 1, 4>}, {transform_indices = @transform_17, window_bounds = array<i64: 1, 16, 4>}]} {
    %c0 = arith.constant 0 : index
    %c0_0 = arith.constant 0 : index
    %c0_1 = arith.constant 0 : index
    %0 = vector.load %arg2[%c0, %c0_0, %c0_1] : memref<1x1x8xf32, #tpu.memory_space<vmem>>, vector<1x1x8xf32>
    %1 = vector.shape_cast %0 : vector<1x1x8xf32> to vector<1x8xf32>
    %c0_2 = arith.constant 0 : index
    %c0_3 = arith.constant 0 : index
    %2 = vector.load %arg3[%c0_2, %c0_3] : memref<8x12xf32, #tpu.memory_space<vmem>>, vector<8x12xf32>
    %cst = arith.constant dense<0.000000e+00> : vector<1x12xf32>
    %3 = tpu.matmul %1, %2, %cst {dimension_numbers = #tpu.dot_dimension_numbers<[1], [0], [0], [1], [0, 0, 1, 1], [], []>} : vector<1x8xf32>, vector<8x12xf32>, vector<1x12xf32> -> vector<1x12xf32>
    %c0_4 = arith.constant 0 : index
    %c0_5 = arith.constant 0 : index
    %4 = vector.load %arg4[%c0_4, %c0_5] : memref<1x12xf32, #tpu.memory_space<vmem>>, vector<1x12xf32>
    %5 = arith.addf %3, %4 : vector<1x12xf32>
    %6 = vector.extract_strided_slice %5 {offsets = [0, 0], sizes = [1, 4], strides = [1, 1]} : vector<1x12xf32> to vector<1x4xf32>
    %cst_6 = arith.constant 0.000000e+00 : f32
    %7 = vector.broadcast %cst_6 : f32 to vector<1x4xf32>
    %8 = arith.maximumf %6, %7 : vector<1x4xf32>
    %9 = vector.extract_strided_slice %5 {offsets = [0, 4], sizes = [1, 8], strides = [1, 1]} : vector<1x12xf32> to vector<1x8xf32>
    %cst_7 = arith.constant 0.000000e+00 : f32
    %10 = vector.broadcast %cst_7 : f32 to vector<1x8xf32>
    %11 = arith.maximumf %9, %10 : vector<1x8xf32>
    %c0_8 = arith.constant 0 : index
    %c0_9 = arith.constant 0 : index
    %12 = vector.load %arg5[%c0_8, %c0_9] : memref<4x4xf32, #tpu.memory_space<vmem>>, vector<4x4xf32>
    %cst_10 = arith.constant dense<0.000000e+00> : vector<1x4xf32>
    %13 = tpu.matmul %8, %12, %cst_10 {dimension_numbers = #tpu.dot_dimension_numbers<[1], [0], [0], [1], [0, 0, 1, 1], [], []>} : vector<1x4xf32>, vector<4x4xf32>, vector<1x4xf32> -> vector<1x4xf32>
    %c0_11 = arith.constant 0 : index
    %c0_12 = arith.constant 0 : index
    %14 = vector.load %arg6[%c0_11, %c0_12] : memref<1x4xf32, #tpu.memory_space<vmem>>, vector<1x4xf32>
    %15 = arith.addf %13, %14 : vector<1x4xf32>
    %c0_13 = arith.constant 0 : index
    %c0_14 = arith.constant 0 : index
    %16 = vector.load %arg7[%c0_13, %c0_14] : memref<8x8xf32, #tpu.memory_space<vmem>>, vector<8x8xf32>
    %cst_15 = arith.constant dense<0.000000e+00> : vector<1x8xf32>
    %17 = tpu.matmul %11, %16, %cst_15 {dimension_numbers = #tpu.dot_dimension_numbers<[1], [0], [0], [1], [0, 0, 1, 1], [], []>} : vector<1x8xf32>, vector<8x8xf32>, vector<1x8xf32> -> vector<1x8xf32>
    %c0_16 = arith.constant 0 : index
    %c0_17 = arith.constant 0 : index
    %18 = vector.load %arg8[%c0_16, %c0_17] : memref<1x8xf32, #tpu.memory_space<vmem>>, vector<1x8xf32>
    %19 = arith.addf %17, %18 : vector<1x8xf32>
    %c0_18 = arith.constant 0 : index
    %c0_19 = arith.constant 0 : index
    %20 = vector.load %arg9[%c0_18, %c0_19] : memref<16x2xf32, #tpu.memory_space<vmem>>, vector<16x2xf32>
    %cst_20 = arith.constant 0.000000e+00 : f32
    %21 = vector.broadcast %cst_20 : f32 to vector<16x4xf32>
    %22 = vector.extract_strided_slice %20 {offsets = [0, 0], sizes = [16, 1], strides = [1, 1]} : vector<16x2xf32> to vector<16x1xf32>
    %23 = vector.extract_strided_slice %19 {offsets = [0, 0], sizes = [1, 4], strides = [1, 1]} : vector<1x8xf32> to vector<1x4xf32>
    %24 = vector.broadcast %22 : vector<16x1xf32> to vector<16x4xf32>
    %25 = vector.broadcast %23 : vector<1x4xf32> to vector<16x4xf32>
    %26 = arith.mulf %24, %25 : vector<16x4xf32>
    %27 = arith.addf %21, %26 : vector<16x4xf32>
    %28 = vector.extract_strided_slice %20 {offsets = [0, 1], sizes = [16, 1], strides = [1, 1]} : vector<16x2xf32> to vector<16x1xf32>
    %29 = vector.extract_strided_slice %19 {offsets = [0, 4], sizes = [1, 4], strides = [1, 1]} : vector<1x8xf32> to vector<1x4xf32>
    %30 = vector.broadcast %28 : vector<16x1xf32> to vector<16x4xf32>
    %31 = vector.broadcast %29 : vector<1x4xf32> to vector<16x4xf32>
    %32 = arith.mulf %30, %31 : vector<16x4xf32>
    %33 = arith.addf %27, %32 : vector<16x4xf32>
    %c0_21 = arith.constant 0 : index
    %c0_22 = arith.constant 0 : index
    %34 = vector.load %arg11[%c0_21, %c0_22] : memref<16x4xf32, #tpu.memory_space<vmem>>, vector<16x4xf32>
    %35 = arith.index_cast %arg0 : i32 to index
    %c0_23 = arith.constant 0 : index
    %36 = memref.load %arg1[%35, %c0_23] : memref<2x8xf32, #tpu.memory_space<smem>>
    %c0_24 = arith.constant 0 : index
    %c0_25 = arith.constant 0 : index
    %c0_26 = arith.constant 0 : index
    %37 = vector.load %arg10[%c0_24, %c0_25, %c0_26] : memref<8x16x4xf32, #tpu.memory_space<vmem>>, vector<1x16x4xf32>
    %38 = vector.shape_cast %37 : vector<1x16x4xf32> to vector<16x4xf32>
    %39 = vector.broadcast %36 : f32 to vector<16x4xf32>
    %40 = arith.mulf %39, %38 : vector<16x4xf32>
    %41 = arith.addf %34, %40 : vector<16x4xf32>
    %42 = arith.index_cast %arg0 : i32 to index
    %c1 = arith.constant 1 : index
    %43 = memref.load %arg1[%42, %c1] : memref<2x8xf32, #tpu.memory_space<smem>>
    %c1_27 = arith.constant 1 : index
    %c0_28 = arith.constant 0 : index
    %c0_29 = arith.constant 0 : index
    %44 = vector.load %arg10[%c1_27, %c0_28, %c0_29] : memref<8x16x4xf32, #tpu.memory_space<vmem>>, vector<1x16x4xf32>
    %45 = vector.shape_cast %44 : vector<1x16x4xf32> to vector<16x4xf32>
    %46 = vector.broadcast %43 : f32 to vector<16x4xf32>
    %47 = arith.mulf %46, %45 : vector<16x4xf32>
    %48 = arith.addf %41, %47 : vector<16x4xf32>
    %49 = arith.index_cast %arg0 : i32 to index
    %c2 = arith.constant 2 : index
    %50 = memref.load %arg1[%49, %c2] : memref<2x8xf32, #tpu.memory_space<smem>>
    %c2_30 = arith.constant 2 : index
    %c0_31 = arith.constant 0 : index
    %c0_32 = arith.constant 0 : index
    %51 = vector.load %arg10[%c2_30, %c0_31, %c0_32] : memref<8x16x4xf32, #tpu.memory_space<vmem>>, vector<1x16x4xf32>
    %52 = vector.shape_cast %51 : vector<1x16x4xf32> to vector<16x4xf32>
    %53 = vector.broadcast %50 : f32 to vector<16x4xf32>
    %54 = arith.mulf %53, %52 : vector<16x4xf32>
    %55 = arith.addf %48, %54 : vector<16x4xf32>
    %56 = arith.index_cast %arg0 : i32 to index
    %c3 = arith.constant 3 : index
    %57 = memref.load %arg1[%56, %c3] : memref<2x8xf32, #tpu.memory_space<smem>>
    %c3_33 = arith.constant 3 : index
    %c0_34 = arith.constant 0 : index
    %c0_35 = arith.constant 0 : index
    %58 = vector.load %arg10[%c3_33, %c0_34, %c0_35] : memref<8x16x4xf32, #tpu.memory_space<vmem>>, vector<1x16x4xf32>
    %59 = vector.shape_cast %58 : vector<1x16x4xf32> to vector<16x4xf32>
    %60 = vector.broadcast %57 : f32 to vector<16x4xf32>
    %61 = arith.mulf %60, %59 : vector<16x4xf32>
    %62 = arith.addf %55, %61 : vector<16x4xf32>
    %63 = arith.index_cast %arg0 : i32 to index
    %c4 = arith.constant 4 : index
    %64 = memref.load %arg1[%63, %c4] : memref<2x8xf32, #tpu.memory_space<smem>>
    %c4_36 = arith.constant 4 : index
    %c0_37 = arith.constant 0 : index
    %c0_38 = arith.constant 0 : index
    %65 = vector.load %arg10[%c4_36, %c0_37, %c0_38] : memref<8x16x4xf32, #tpu.memory_space<vmem>>, vector<1x16x4xf32>
    %66 = vector.shape_cast %65 : vector<1x16x4xf32> to vector<16x4xf32>
    %67 = vector.broadcast %64 : f32 to vector<16x4xf32>
    %68 = arith.mulf %67, %66 : vector<16x4xf32>
    %69 = arith.addf %62, %68 : vector<16x4xf32>
    %70 = arith.index_cast %arg0 : i32 to index
    %c5 = arith.constant 5 : index
    %71 = memref.load %arg1[%70, %c5] : memref<2x8xf32, #tpu.memory_space<smem>>
    %c5_39 = arith.constant 5 : index
    %c0_40 = arith.constant 0 : index
    %c0_41 = arith.constant 0 : index
    %72 = vector.load %arg10[%c5_39, %c0_40, %c0_41] : memref<8x16x4xf32, #tpu.memory_space<vmem>>, vector<1x16x4xf32>
    %73 = vector.shape_cast %72 : vector<1x16x4xf32> to vector<16x4xf32>
    %74 = vector.broadcast %71 : f32 to vector<16x4xf32>
    %75 = arith.mulf %74, %73 : vector<16x4xf32>
    %76 = arith.addf %69, %75 : vector<16x4xf32>
    %77 = arith.index_cast %arg0 : i32 to index
    %c6 = arith.constant 6 : index
    %78 = memref.load %arg1[%77, %c6] : memref<2x8xf32, #tpu.memory_space<smem>>
    %c6_42 = arith.constant 6 : index
    %c0_43 = arith.constant 0 : index
    %c0_44 = arith.constant 0 : index
    %79 = vector.load %arg10[%c6_42, %c0_43, %c0_44] : memref<8x16x4xf32, #tpu.memory_space<vmem>>, vector<1x16x4xf32>
    %80 = vector.shape_cast %79 : vector<1x16x4xf32> to vector<16x4xf32>
    %81 = vector.broadcast %78 : f32 to vector<16x4xf32>
    %82 = arith.mulf %81, %80 : vector<16x4xf32>
    %83 = arith.addf %76, %82 : vector<16x4xf32>
    %84 = arith.index_cast %arg0 : i32 to index
    %c7 = arith.constant 7 : index
    %85 = memref.load %arg1[%84, %c7] : memref<2x8xf32, #tpu.memory_space<smem>>
    %c7_45 = arith.constant 7 : index
    %c0_46 = arith.constant 0 : index
    %c0_47 = arith.constant 0 : index
    %86 = vector.load %arg10[%c7_45, %c0_46, %c0_47] : memref<8x16x4xf32, #tpu.memory_space<vmem>>, vector<1x16x4xf32>
    %87 = vector.shape_cast %86 : vector<1x16x4xf32> to vector<16x4xf32>
    %88 = vector.broadcast %85 : f32 to vector<16x4xf32>
    %89 = arith.mulf %88, %87 : vector<16x4xf32>
    %90 = arith.addf %83, %89 : vector<16x4xf32>
    %91 = tpu.iota {dimensions = array<i32: 0>} : vector<16x16xi32>
    %92 = tpu.iota {dimensions = array<i32: 1>} : vector<16x16xi32>
    %c1_i32 = arith.constant 1 : i32
    %93 = vector.broadcast %c1_i32 : i32 to vector<16x16xi32>
    %94 = arith.addi %92, %93 : vector<16x16xi32>
    %95 = arith.cmpi eq, %91, %94 : vector<16x16xi32>
    %96 = arith.extui %95 : vector<16x16xi1> to vector<16x16xi32>
    %97 = arith.sitofp %96 : vector<16x16xi32> to vector<16x16xf32>
    %c1_i32_48 = arith.constant 1 : i32
    %98 = vector.broadcast %c1_i32_48 : i32 to vector<16x16xi32>
    %99 = arith.addi %91, %98 : vector<16x16xi32>
    %100 = arith.cmpi eq, %99, %92 : vector<16x16xi32>
    %101 = arith.extui %100 : vector<16x16xi1> to vector<16x16xi32>
    %102 = arith.sitofp %101 : vector<16x16xi32> to vector<16x16xf32>
    %103 = vector.shape_cast %1 : vector<1x8xf32> to vector<1x8xf32>
    %104 = vector.broadcast %103 : vector<1x8xf32> to vector<16x8xf32>
    %c0_49 = arith.constant 0 : index
    %c0_50 = arith.constant 0 : index
    %105 = vector.load %arg12[%c0_49, %c0_50] : memref<24x16xf32, #tpu.memory_space<vmem>>, vector<24x16xf32>
    %c0_51 = arith.constant 0 : index
    %c0_52 = arith.constant 0 : index
    %106 = vector.load %arg13[%c0_51, %c0_52] : memref<1x16xf32, #tpu.memory_space<vmem>>, vector<1x16xf32>
    %cst_53 = arith.constant dense<0.000000e+00> : vector<16x8xf32>
    %107 = tpu.matmul %97, %104, %cst_53 {dimension_numbers = #tpu.dot_dimension_numbers<[1], [0], [0], [1], [0, 0, 1, 1], [], []>} : vector<16x16xf32>, vector<16x8xf32>, vector<16x8xf32> -> vector<16x8xf32>
    %cst_54 = arith.constant dense<0.000000e+00> : vector<16x8xf32>
    %108 = tpu.matmul %102, %104, %cst_54 {dimension_numbers = #tpu.dot_dimension_numbers<[1], [0], [0], [1], [0, 0, 1, 1], [], []>} : vector<16x16xf32>, vector<16x8xf32>, vector<16x8xf32> -> vector<16x8xf32>
    %109 = vector.extract_strided_slice %105 {offsets = [0, 0], sizes = [8, 16], strides = [1, 1]} : vector<24x16xf32> to vector<8x16xf32>
    %cst_55 = arith.constant dense<0.000000e+00> : vector<16x16xf32>
    %110 = tpu.matmul %107, %109, %cst_55 {dimension_numbers = #tpu.dot_dimension_numbers<[1], [0], [0], [1], [0, 0, 1, 1], [], []>} : vector<16x8xf32>, vector<8x16xf32>, vector<16x16xf32> -> vector<16x16xf32>
    %111 = vector.extract_strided_slice %105 {offsets = [8, 0], sizes = [8, 16], strides = [1, 1]} : vector<24x16xf32> to vector<8x16xf32>
    %cst_56 = arith.constant dense<0.000000e+00> : vector<16x16xf32>
    %112 = tpu.matmul %104, %111, %cst_56 {dimension_numbers = #tpu.dot_dimension_numbers<[1], [0], [0], [1], [0, 0, 1, 1], [], []>} : vector<16x8xf32>, vector<8x16xf32>, vector<16x16xf32> -> vector<16x16xf32>
    %113 = arith.addf %110, %112 : vector<16x16xf32>
    %114 = vector.extract_strided_slice %105 {offsets = [16, 0], sizes = [8, 16], strides = [1, 1]} : vector<24x16xf32> to vector<8x16xf32>
    %cst_57 = arith.constant dense<0.000000e+00> : vector<16x16xf32>
    %115 = tpu.matmul %108, %114, %cst_57 {dimension_numbers = #tpu.dot_dimension_numbers<[1], [0], [0], [1], [0, 0, 1, 1], [], []>} : vector<16x8xf32>, vector<8x16xf32>, vector<16x16xf32> -> vector<16x16xf32>
    %116 = arith.addf %113, %115 : vector<16x16xf32>
    %117 = vector.broadcast %106 : vector<1x16xf32> to vector<16x16xf32>
    %118 = arith.addf %116, %117 : vector<16x16xf32>
    %cst_58 = arith.constant 0.000000e+00 : f32
    %119 = vector.broadcast %cst_58 : f32 to vector<16x16xf32>
    %120 = arith.maximumf %118, %119 : vector<16x16xf32>
    %c0_59 = arith.constant 0 : index
    %c0_60 = arith.constant 0 : index
    %121 = vector.load %arg14[%c0_59, %c0_60] : memref<48x32xf32, #tpu.memory_space<vmem>>, vector<48x32xf32>
    %c0_61 = arith.constant 0 : index
    %c0_62 = arith.constant 0 : index
    %122 = vector.load %arg15[%c0_61, %c0_62] : memref<1x32xf32, #tpu.memory_space<vmem>>, vector<1x32xf32>
    %cst_63 = arith.constant dense<0.000000e+00> : vector<16x16xf32>
    %123 = tpu.matmul %97, %120, %cst_63 {dimension_numbers = #tpu.dot_dimension_numbers<[1], [0], [0], [1], [0, 0, 1, 1], [], []>} : vector<16x16xf32>, vector<16x16xf32>, vector<16x16xf32> -> vector<16x16xf32>
    %cst_64 = arith.constant dense<0.000000e+00> : vector<16x16xf32>
    %124 = tpu.matmul %102, %120, %cst_64 {dimension_numbers = #tpu.dot_dimension_numbers<[1], [0], [0], [1], [0, 0, 1, 1], [], []>} : vector<16x16xf32>, vector<16x16xf32>, vector<16x16xf32> -> vector<16x16xf32>
    %125 = vector.extract_strided_slice %121 {offsets = [0, 0], sizes = [16, 32], strides = [1, 1]} : vector<48x32xf32> to vector<16x32xf32>
    %cst_65 = arith.constant dense<0.000000e+00> : vector<16x32xf32>
    %126 = tpu.matmul %123, %125, %cst_65 {dimension_numbers = #tpu.dot_dimension_numbers<[1], [0], [0], [1], [0, 0, 1, 1], [], []>} : vector<16x16xf32>, vector<16x32xf32>, vector<16x32xf32> -> vector<16x32xf32>
    %127 = vector.extract_strided_slice %121 {offsets = [16, 0], sizes = [16, 32], strides = [1, 1]} : vector<48x32xf32> to vector<16x32xf32>
    %cst_66 = arith.constant dense<0.000000e+00> : vector<16x32xf32>
    %128 = tpu.matmul %120, %127, %cst_66 {dimension_numbers = #tpu.dot_dimension_numbers<[1], [0], [0], [1], [0, 0, 1, 1], [], []>} : vector<16x16xf32>, vector<16x32xf32>, vector<16x32xf32> -> vector<16x32xf32>
    %129 = arith.addf %126, %128 : vector<16x32xf32>
    %130 = vector.extract_strided_slice %121 {offsets = [32, 0], sizes = [16, 32], strides = [1, 1]} : vector<48x32xf32> to vector<16x32xf32>
    %cst_67 = arith.constant dense<0.000000e+00> : vector<16x32xf32>
    %131 = tpu.matmul %124, %130, %cst_67 {dimension_numbers = #tpu.dot_dimension_numbers<[1], [0], [0], [1], [0, 0, 1, 1], [], []>} : vector<16x16xf32>, vector<16x32xf32>, vector<16x32xf32> -> vector<16x32xf32>
    %132 = arith.addf %129, %131 : vector<16x32xf32>
    %133 = vector.broadcast %122 : vector<1x32xf32> to vector<16x32xf32>
    %134 = arith.addf %132, %133 : vector<16x32xf32>
    %cst_68 = arith.constant 0.000000e+00 : f32
    %135 = vector.broadcast %cst_68 : f32 to vector<16x32xf32>
    %136 = arith.maximumf %134, %135 : vector<16x32xf32>
    %c0_69 = arith.constant 0 : index
    %c0_70 = arith.constant 0 : index
    %137 = vector.load %arg16[%c0_69, %c0_70] : memref<96x4xf32, #tpu.memory_space<vmem>>, vector<96x4xf32>
    %c0_71 = arith.constant 0 : index
    %c0_72 = arith.constant 0 : index
    %138 = vector.load %arg17[%c0_71, %c0_72] : memref<1x4xf32, #tpu.memory_space<vmem>>, vector<1x4xf32>
    %cst_73 = arith.constant dense<0.000000e+00> : vector<16x32xf32>
    %139 = tpu.matmul %97, %136, %cst_73 {dimension_numbers = #tpu.dot_dimension_numbers<[1], [0], [0], [1], [0, 0, 1, 1], [], []>} : vector<16x16xf32>, vector<16x32xf32>, vector<16x32xf32> -> vector<16x32xf32>
    %cst_74 = arith.constant dense<0.000000e+00> : vector<16x32xf32>
    %140 = tpu.matmul %102, %136, %cst_74 {dimension_numbers = #tpu.dot_dimension_numbers<[1], [0], [0], [1], [0, 0, 1, 1], [], []>} : vector<16x16xf32>, vector<16x32xf32>, vector<16x32xf32> -> vector<16x32xf32>
    %141 = vector.extract_strided_slice %137 {offsets = [0, 0], sizes = [32, 4], strides = [1, 1]} : vector<96x4xf32> to vector<32x4xf32>
    %cst_75 = arith.constant dense<0.000000e+00> : vector<16x4xf32>
    %142 = tpu.matmul %139, %141, %cst_75 {dimension_numbers = #tpu.dot_dimension_numbers<[1], [0], [0], [1], [0, 0, 1, 1], [], []>} : vector<16x32xf32>, vector<32x4xf32>, vector<16x4xf32> -> vector<16x4xf32>
    %143 = vector.extract_strided_slice %137 {offsets = [32, 0], sizes = [32, 4], strides = [1, 1]} : vector<96x4xf32> to vector<32x4xf32>
    %cst_76 = arith.constant dense<0.000000e+00> : vector<16x4xf32>
    %144 = tpu.matmul %136, %143, %cst_76 {dimension_numbers = #tpu.dot_dimension_numbers<[1], [0], [0], [1], [0, 0, 1, 1], [], []>} : vector<16x32xf32>, vector<32x4xf32>, vector<16x4xf32> -> vector<16x4xf32>
    %145 = arith.addf %142, %144 : vector<16x4xf32>
    %146 = vector.extract_strided_slice %137 {offsets = [64, 0], sizes = [32, 4], strides = [1, 1]} : vector<96x4xf32> to vector<32x4xf32>
    %cst_77 = arith.constant dense<0.000000e+00> : vector<16x4xf32>
    %147 = tpu.matmul %140, %146, %cst_77 {dimension_numbers = #tpu.dot_dimension_numbers<[1], [0], [0], [1], [0, 0, 1, 1], [], []>} : vector<16x32xf32>, vector<32x4xf32>, vector<16x4xf32> -> vector<16x4xf32>
    %148 = arith.addf %145, %147 : vector<16x4xf32>
    %149 = vector.broadcast %138 : vector<1x4xf32> to vector<16x4xf32>
    %150 = arith.addf %148, %149 : vector<16x4xf32>
    %151 = arith.addf %150, %33 : vector<16x4xf32>
    %152 = arith.addf %151, %90 : vector<16x4xf32>
    %153 = vector.broadcast %15 : vector<1x4xf32> to vector<16x4xf32>
    %154 = arith.addf %152, %153 : vector<16x4xf32>
    %c0_78 = arith.constant 0 : index
    %c0_79 = arith.constant 0 : index
    %c0_80 = arith.constant 0 : index
    %155 = vector.load %arg18[%c0_78, %c0_79, %c0_80] : memref<1x16x4xf32, #tpu.memory_space<vmem>>, vector<1x16x4xf32>
    %156 = vector.shape_cast %155 : vector<1x16x4xf32> to vector<16x4xf32>
    %157 = vector.shape_cast %154 : vector<16x4xf32> to vector<1x16x4xf32>
    tpu.vector_store %arg18[%c0_78, %c0_79, %c0_80], %157 {strides = array<i32>} : memref<1x16x4xf32, #tpu.memory_space<vmem>>, vector<1x16x4xf32>,
    return
  }
  func.func @transform_0(%arg0: i32) -> (i32, i32) {
    %c0_i32 = arith.constant 0 : i32
    %c0_i32_0 = arith.constant 0 : i32
    %c0_i32_1 = arith.constant 0 : i32
    return %c0_i32, %c0_i32_0 : i32, i32
  }
  func.func @transform_1(%arg0: i32) -> (i32, i32, i32) {
    %c0_i32 = arith.constant 0 : i32
    %c0_i32_0 = arith.constant 0 : i32
    %c0_i32_1 = arith.constant 0 : i32
    return %arg0, %c0_i32, %c0_i32_0 : i32, i32, i32
  }
  func.func @transform_2(%arg0: i32) -> (i32, i32) {
    %c0_i32 = arith.constant 0 : i32
    %c0_i32_0 = arith.constant 0 : i32
    %c0_i32_1 = arith.constant 0 : i32
    return %c0_i32, %c0_i32_0 : i32, i32
  }
  func.func @transform_3(%arg0: i32) -> (i32, i32) {
    %c0_i32 = arith.constant 0 : i32
    %c0_i32_0 = arith.constant 0 : i32
    %c0_i32_1 = arith.constant 0 : i32
    return %c0_i32, %c0_i32_0 : i32, i32
  }
  func.func @transform_4(%arg0: i32) -> (i32, i32) {
    %c0_i32 = arith.constant 0 : i32
    %c0_i32_0 = arith.constant 0 : i32
    %c0_i32_1 = arith.constant 0 : i32
    return %c0_i32, %c0_i32_0 : i32, i32
  }
  func.func @transform_5(%arg0: i32) -> (i32, i32) {
    %c0_i32 = arith.constant 0 : i32
    %c0_i32_0 = arith.constant 0 : i32
    %c0_i32_1 = arith.constant 0 : i32
    return %c0_i32, %c0_i32_0 : i32, i32
  }
  func.func @transform_6(%arg0: i32) -> (i32, i32) {
    %c0_i32 = arith.constant 0 : i32
    %c0_i32_0 = arith.constant 0 : i32
    %c0_i32_1 = arith.constant 0 : i32
    return %c0_i32, %c0_i32_0 : i32, i32
  }
  func.func @transform_7(%arg0: i32) -> (i32, i32) {
    %c0_i32 = arith.constant 0 : i32
    %c0_i32_0 = arith.constant 0 : i32
    %c0_i32_1 = arith.constant 0 : i32
    return %c0_i32, %c0_i32_0 : i32, i32
  }
  func.func @transform_8(%arg0: i32) -> (i32, i32) {
    %c0_i32 = arith.constant 0 : i32
    %c0_i32_0 = arith.constant 0 : i32
    %c0_i32_1 = arith.constant 0 : i32
    return %c0_i32, %c0_i32_0 : i32, i32
  }
  func.func @transform_9(%arg0: i32) -> (i32, i32, i32) {
    %c0_i32 = arith.constant 0 : i32
    %c0_i32_0 = arith.constant 0 : i32
    %c0_i32_1 = arith.constant 0 : i32
    %c0_i32_2 = arith.constant 0 : i32
    return %c0_i32, %c0_i32_0, %c0_i32_1 : i32, i32, i32
  }
  func.func @transform_10(%arg0: i32) -> (i32, i32) {
    %c0_i32 = arith.constant 0 : i32
    %c0_i32_0 = arith.constant 0 : i32
    %c0_i32_1 = arith.constant 0 : i32
    return %c0_i32, %c0_i32_0 : i32, i32
  }
  func.func @transform_11(%arg0: i32) -> (i32, i32) {
    %c0_i32 = arith.constant 0 : i32
    %c0_i32_0 = arith.constant 0 : i32
    %c0_i32_1 = arith.constant 0 : i32
    return %c0_i32, %c0_i32_0 : i32, i32
  }
  func.func @transform_12(%arg0: i32) -> (i32, i32) {
    %c0_i32 = arith.constant 0 : i32
    %c0_i32_0 = arith.constant 0 : i32
    %c0_i32_1 = arith.constant 0 : i32
    return %c0_i32, %c0_i32_0 : i32, i32
  }
  func.func @transform_13(%arg0: i32) -> (i32, i32) {
    %c0_i32 = arith.constant 0 : i32
    %c0_i32_0 = arith.constant 0 : i32
    %c0_i32_1 = arith.constant 0 : i32
    return %c0_i32, %c0_i32_0 : i32, i32
  }
  func.func @transform_14(%arg0: i32) -> (i32, i32) {
    %c0_i32 = arith.constant 0 : i32
    %c0_i32_0 = arith.constant 0 : i32
    %c0_i32_1 = arith.constant 0 : i32
    return %c0_i32, %c0_i32_0 : i32, i32
  }
  func.func @transform_15(%arg0: i32) -> (i32, i32) {
    %c0_i32 = arith.constant 0 : i32
    %c0_i32_0 = arith.constant 0 : i32
    %c0_i32_1 = arith.constant 0 : i32
    return %c0_i32, %c0_i32_0 : i32, i32
  }
  func.func @transform_16(%arg0: i32) -> (i32, i32) {
    %c0_i32 = arith.constant 0 : i32
    %c0_i32_0 = arith.constant 0 : i32
    %c0_i32_1 = arith.constant 0 : i32
    return %c0_i32, %c0_i32_0 : i32, i32
  }
  func.func @transform_17(%arg0: i32) -> (i32, i32, i32) {
    %c0_i32 = arith.constant 0 : i32
    %c0_i32_0 = arith.constant 0 : i32
    %c0_i32_1 = arith.constant 0 : i32
    return %arg0, %c0_i32, %c0_i32_0 : i32, i32, i32
  }
}

</mosaic_0001>

<llo_original>
// kernel: trend_vae_decoder_forward.1
$region0: #{trend_vae_decoder_forward.1}
  #allocation0 [shape = 'u32[]', space=smem, size = 0x4, offset = 0x4, fixed_abs, tag = 'smem constant byte address 0x4 - core index']
  #allocation1 [shape = 'u32[144,128]{1,0:T(1,128)}', space=vmem, size = 0x12000, scoped, tag = 'internal scratch']
  %s0 = inlined_call_operand.vmem [shape: f32[2,8], index: 0, kind: input, shape index: {}, may-alias: {0,1}]
  %s1 = inlined_call_operand.vmem [shape: f32[2,1,8], index: 1, kind: input, shape index: {}, may-alias: {0,1}]
  %s2 = inlined_call_operand.vmem [shape: f32[8,12], index: 2, kind: input, shape index: {}]
  %s3 = inlined_call_operand.vmem [shape: f32[1,12], index: 3, kind: input, shape index: {}]
  %s4 = inlined_call_operand.vmem [shape: f32[4,4], index: 4, kind: input, shape index: {}]
  %s5 = inlined_call_operand.vmem [shape: f32[1,4], index: 5, kind: input, shape index: {}]
  %s6 = inlined_call_operand.vmem [shape: f32[8,8], index: 6, kind: input, shape index: {}]
  %s7 = inlined_call_operand.vmem [shape: f32[1,8], index: 7, kind: input, shape index: {}]
  %s8 = inlined_call_operand.vmem [shape: f32[16,2], index: 8, kind: input, shape index: {}]
  %s9 = inlined_call_operand.vmem [shape: f32[8,16,4], index: 9, kind: input, shape index: {}]
  %s10 = inlined_call_operand.vmem [shape: f32[16,4], index: 10, kind: input, shape index: {}]
  %s11 = inlined_call_operand.vmem [shape: f32[24,16], index: 11, kind: input, shape index: {}]
  %s12 = inlined_call_operand.vmem [shape: f32[1,16], index: 12, kind: input, shape index: {}]
  %s13 = inlined_call_operand.vmem [shape: f32[48,32], index: 13, kind: input, shape index: {}]
  %s14 = inlined_call_operand.vmem [shape: f32[1,32], index: 14, kind: input, shape index: {}]
  %s15 = inlined_call_operand.vmem [shape: f32[96,4], index: 15, kind: input, shape index: {}]
  %s16 = inlined_call_operand.vmem [shape: f32[1,4], index: 16, kind: input, shape index: {}]
  %s17 = inlined_call_operand.vmem [shape: f32[2,16,4], index: 17, kind: output, shape index: {}]
  %s18 = sld [smem:[#allocation0]]
  $region105: #{trend_vae_decoder_forward.1} parent=0
    _
  %s20 = ssub.s32 1, %s18
  %s21 = scalar_select 0, %s20, %s18
  $region1: #{trend_vae_decoder_forward.1} parent=0
    #allocation2 [shape = 'u8[1024]{0}', space=smem, size = 0x400, scoped, tag = 'input window, operand 0, single buffered']
    #allocation3 [shape = 's32[2]{0}', space=sflag, size = 0x8, scoped, tag = 'scoped memory for trend_vae_decoder_forward.1']
    %22 = vsyncpa [#allocation3], 0
    loop: start=0, step=1, limit=4
    $region2: #{trend_vae_decoder_forward.1} parent=1 // loop_pre_header
      _
    $region3: #{trend_vae_decoder_forward.1} parent=1 // loop_header
      %s24 = sphi 0, %s28
      %p25 = scmp.ge.s32.totalorder %s24, 4
      %s32 = sphi 0, %s32
      %s34 = sphi 0, %s32
      %s35 = sphi 0, %s34
      %s49 = sphi 0, %s35
      %s55 = sphi 0, %s57
      %s58 = sphi 0, %s55
      %s59 = sphi 0, %s58
      %s75 = sphi 0, %s59
      %s79 = sphi 0, %s79
      %s81 = sphi 0, %s79
      %s82 = sphi 0, %s81
      %s96 = sphi 0, %s82
      %s100 = sphi 0, %s100
      %s102 = sphi 0, %s100
      %s103 = sphi 0, %s102
      %s117 = sphi 0, %s103
      %s121 = sphi 0, %s121
      %s123 = sphi 0, %s121
      %s124 = sphi 0, %s123
      %s138 = sphi 0, %s124
      %s142 = sphi 0, %s142
      %s144 = sphi 0, %s142
      %s145 = sphi 0, %s144
      %s159 = sphi 0, %s145
      %s163 = sphi 0, %s163
      %s165 = sphi 0, %s163
      %s166 = sphi 0, %s165
      %s180 = sphi 0, %s166
      %s184 = sphi 0, %s184
      %s186 = sphi 0, %s184
      %s187 = sphi 0, %s186
      %s201 = sphi 0, %s187
      %s205 = sphi 0, %s205
      %s207 = sphi 0, %s205
      %s208 = sphi 0, %s207
      %s222 = sphi 0, %s208
      %s226 = sphi 0, %s226
      %s228 = sphi 0, %s226
      %s229 = sphi 0, %s228
      %s243 = sphi 0, %s229
      %s247 = sphi 0, %s247
      %s249 = sphi 0, %s247
      %s250 = sphi 0, %s249
      %s264 = sphi 0, %s250
      %s268 = sphi 0, %s268
      %s270 = sphi 0, %s268
      %s271 = sphi 0, %s270
      %s285 = sphi 0, %s271
      %s289 = sphi 0, %s289
      %s291 = sphi 0, %s289
      %s292 = sphi 0, %s291
      %s306 = sphi 0, %s292
      %s310 = sphi 0, %s310
      %s312 = sphi 0, %s310
      %s313 = sphi 0, %s312
      %s327 = sphi 0, %s313
      %s331 = sphi 0, %s331
      %s333 = sphi 0, %s331
      %s334 = sphi 0, %s333
      %s348 = sphi 0, %s334
      %s352 = sphi 0, %s352
      %s354 = sphi 0, %s352
      %s355 = sphi 0, %s354
      %s369 = sphi 0, %s355
      %s373 = sphi 0, %s373
      %s375 = sphi 0, %s373
      %s376 = sphi 0, %s375
      %s390 = sphi 0, %s376
      %s396 = sphi 0, %s398
      %s399 = sphi 0, %s396
      %s400 = sphi 0, %s399
      %s416 = sphi 0, %s400
    $region4: #{trend_vae_decoder_forward.1} parent=1 // loop_header_branch
      %27 = sbr.rel (%p25) target = $region8
    $region5: #{trend_vae_decoder_forward.1} parent=1 // loop_body
      %s29 = ssub.s32 %s24, 1
      %s30 = ssub.s32 %s24, 2
      %s31 = sadd.s32 %s24, 1
      %s33 = sadd.s32 %s32, 1
      %p36 = scmp.eq.s32.totalorder %s24, 1
      %p37 = scmp.ne.s32.totalorder %s32, %s34
      %p38 = scmp.eq.s32.totalorder %s24, 0
      %p39 = por %p37, %p38
      %p40 = scmp.ne.s32.totalorder %s32, %s34
      %p41 = scmp.eq.s32.totalorder %s29, 1
      %p42 = por %p40, %p41
      %p43 = scmp.ne.s32.totalorder %s34, %s35
      %p44 = scmp.eq.s32.totalorder %s29, 0
      %p45 = por %p43, %p44
      %p46 = scmp.ne.s32.totalorder %s34, %s35
      %p47 = scmp.eq.s32.totalorder %s30, 1
      %p48 = por %p46, %p47
      %p50 = scmp.ne.s32.totalorder %s35, %s49
      %p51 = scmp.eq.s32.totalorder %s30, 0
      %p52 = por %p50, %p51
      %s53 = ssub.s32 %s24, %s31
      %p54 = scmp.eq.s32.totalorder %s53, 0
      %s56 = sadd.s32 %s55, 1
      %s57 = scalar_select %p54, %s55, %s56
      %p60 = pneg %p54
      %p61 = scmp.eq.s32.totalorder %s24, 1
      %p62 = por %p60, %p61
      %p63 = scmp.ne.s32.totalorder %s55, %s58
      %p64 = scmp.eq.s32.totalorder %s24, 0
      %p65 = por %p63, %p64
      %p66 = scmp.ne.s32.totalorder %s55, %s58
      %p67 = scmp.eq.s32.totalorder %s29, 1
      %p68 = por %p66, %p67
      %p69 = scmp.ne.s32.totalorder %s58, %s59
      %p70 = scmp.eq.s32.totalorder %s29, 0
      %p71 = por %p69, %p70
      %p72 = scmp.ne.s32.totalorder %s58, %s59
      %p73 = scmp.eq.s32.totalorder %s30, 1
      %p74 = por %p72, %p73
      %p76 = scmp.ne.s32.totalorder %s59, %s75
      %p77 = scmp.eq.s32.totalorder %s30, 0
      %p78 = por %p76, %p77
      %s80 = sadd.s32 %s79, 1
      %p83 = scmp.eq.s32.totalorder %s24, 1
      %p84 = scmp.ne.s32.totalorder %s79, %s81
      %p85 = scmp.eq.s32.totalorder %s24, 0
      %p86 = por %p84, %p85
      %p87 = scmp.ne.s32.totalorder %s79, %s81
      %p88 = scmp.eq.s32.totalorder %s29, 1
      %p89 = por %p87, %p88
      %p90 = scmp.ne.s32.totalorder %s81, %s82
      %p91 = scmp.eq.s32.totalorder %s29, 0
      %p92 = por %p90, %p91
      %p93 = scmp.ne.s32.totalorder %s81, %s82
      %p94 = scmp.eq.s32.totalorder %s30, 1
      %p95 = por %p93, %p94
      %p97 = scmp.ne.s32.totalorder %s82, %s96
      %p98 = scmp.eq.s32.totalorder %s30, 0
      %p99 = por %p97, %p98
      %s101 = sadd.s32 %s100, 1
      %p104 = scmp.eq.s32.totalorder %s24, 1
      %p105 = scmp.ne.s32.totalorder %s100, %s102
      %p106 = scmp.eq.s32.totalorder %s24, 0
      %p107 = por %p105, %p106
      %p108 = scmp.ne.s32.totalorder %s100, %s102
      %p109 = scmp.eq.s32.totalorder %s29, 1
      %p110 = por %p108, %p109
      %p111 = scmp.ne.s32.totalorder %s102, %s103
      %p112 = scmp.eq.s32.totalorder %s29, 0
      %p113 = por %p111, %p112
      %p114 = scmp.ne.s32.totalorder %s102, %s103
      %p115 = scmp.eq.s32.totalorder %s30, 1
      %p116 = por %p114, %p115
      %p118 = scmp.ne.s32.totalorder %s103, %s117
      %p119 = scmp.eq.s32.totalorder %s30, 0
      %p120 = por %p118, %p119
      %s122 = sadd.s32 %s121, 1
      %p125 = scmp.eq.s32.totalorder %s24, 1
      %p126 = scmp.ne.s32.totalorder %s121, %s123
      %p127 = scmp.eq.s32.totalorder %s24, 0
      %p128 = por %p126, %p127
      %p129 = scmp.ne.s32.totalorder %s121, %s123
      %p130 = scmp.eq.s32.totalorder %s29, 1
      %p131 = por %p129, %p130
      %p132 = scmp.ne.s32.totalorder %s123, %s124
      %p133 = scmp.eq.s32.totalorder %s29, 0
      %p134 = por %p132, %p133
      %p135 = scmp.ne.s32.totalorder %s123, %s124
      %p136 = scmp.eq.s32.totalorder %s30, 1
      %p137 = por %p135, %p136
      %p139 = scmp.ne.s32.totalorder %s124, %s138
      %p140 = scmp.eq.s32.totalorder %s30, 0
      %p141 = por %p139, %p140
      %s143 = sadd.s32 %s142, 1
      %p146 = scmp.eq.s32.totalorder %s24, 1
      %p147 = scmp.ne.s32.totalorder %s142, %s144
      %p148 = scmp.eq.s32.totalorder %s24, 0
      %p149 = por %p147, %p148
      %p150 = scmp.ne.s32.totalorder %s142, %s144
      %p151 = scmp.eq.s32.totalorder %s29, 1
      %p152 = por %p150, %p151
      %p153 = scmp.ne.s32.totalorder %s144, %s145
      %p154 = scmp.eq.s32.totalorder %s29, 0
      %p155 = por %p153, %p154
      %p156 = scmp.ne.s32.totalorder %s144, %s145
      %p157 = scmp.eq.s32.totalorder %s30, 1
      %p158 = por %p156, %p157
      %p160 = scmp.ne.s32.totalorder %s145, %s159
      %p161 = scmp.eq.s32.totalorder %s30, 0
      %p162 = por %p160, %p161
      %s164 = sadd.s32 %s163, 1
      %p167 = scmp.eq.s32.totalorder %s24, 1
      %p168 = scmp.ne.s32.totalorder %s163, %s165
      %p169 = scmp.eq.s32.totalorder %s24, 0
      %p170 = por %p168, %p169
      %p171 = scmp.ne.s32.totalorder %s163, %s165
      %p172 = scmp.eq.s32.totalorder %s29, 1
      %p173 = por %p171, %p172
      %p174 = scmp.ne.s32.totalorder %s165, %s166
      %p175 = scmp.eq.s32.totalorder %s29, 0
      %p176 = por %p174, %p175
      %p177 = scmp.ne.s32.totalorder %s165, %s166
      %p178 = scmp.eq.s32.totalorder %s30, 1
      %p179 = por %p177, %p178
      %p181 = scmp.ne.s32.totalorder %s166, %s180
      %p182 = scmp.eq.s32.totalorder %s30, 0
      %p183 = por %p181, %p182
      %s185 = sadd.s32 %s184, 1
      %p188 = scmp.eq.s32.totalorder %s24, 1
      %p189 = scmp.ne.s32.totalorder %s184, %s186
      %p190 = scmp.eq.s32.totalorder %s24, 0
      %p191 = por %p189, %p190
      %p192 = scmp.ne.s32.totalorder %s184, %s186
      %p193 = scmp.eq.s32.totalorder %s29, 1
      %p194 = por %p192, %p193
      %p195 = scmp.ne.s32.totalorder %s186, %s187
      %p196 = scmp.eq.s32.totalorder %s29, 0
      %p197 = por %p195, %p196
      %p198 = scmp.ne.s32.totalorder %s186, %s187
      %p199 = scmp.eq.s32.totalorder %s30, 1
      %p200 = por %p198, %p199
      %p202 = scmp.ne.s32.totalorder %s187, %s201
      %p203 = scmp.eq.s32.totalorder %s30, 0
      %p204 = por %p202, %p203
      %s206 = sadd.s32 %s205, 1
      %p209 = scmp.eq.s32.totalorder %s24, 1
      %p210 = scmp.ne.s32.totalorder %s205, %s207
      %p211 = scmp.eq.s32.totalorder %s24, 0
      %p212 = por %p210, %p211
      %p213 = scmp.ne.s32.totalorder %s205, %s207
      %p214 = scmp.eq.s32.totalorder %s29, 1
      %p215 = por %p213, %p214
      %p216 = scmp.ne.s32.totalorder %s207, %s208
      %p217 = scmp.eq.s32.totalorder %s29, 0
      %p218 = por %p216, %p217
      %p219 = scmp.ne.s32.totalorder %s207, %s208
      %p220 = scmp.eq.s32.totalorder %s30, 1
      %p221 = por %p219, %p220
      %p223 = scmp.ne.s32.totalorder %s208, %s222
      %p224 = scmp.eq.s32.totalorder %s30, 0
      %p225 = por %p223, %p224
      %s227 = sadd.s32 %s226, 1
      %p230 = scmp.eq.s32.totalorder %s24, 1
      %p231 = scmp.ne.s32.totalorder %s226, %s228
      %p232 = scmp.eq.s32.totalorder %s24, 0
      %p233 = por %p231, %p232
      %p234 = scmp.ne.s32.totalorder %s226, %s228
      %p235 = scmp.eq.s32.totalorder %s29, 1
      %p236 = por %p234, %p235
      %p237 = scmp.ne.s32.totalorder %s228, %s229
      %p238 = scmp.eq.s32.totalorder %s29, 0
      %p239 = por %p237, %p238
      %p240 = scmp.ne.s32.totalorder %s228, %s229
      %p241 = scmp.eq.s32.totalorder %s30, 1
      %p242 = por %p240, %p241
      %p244 = scmp.ne.s32.totalorder %s229, %s243
      %p245 = scmp.eq.s32.totalorder %s30, 0
      %p246 = por %p244, %p245
      %s248 = sadd.s32 %s247, 1
      %p251 = scmp.eq.s32.totalorder %s24, 1
      %p252 = scmp.ne.s32.totalorder %s247, %s249
      %p253 = scmp.eq.s32.totalorder %s24, 0
      %p254 = por %p252, %p253
      %p255 = scmp.ne.s32.totalorder %s247, %s249
      %p256 = scmp.eq.s32.totalorder %s29, 1
      %p257 = por %p255, %p256
      %p258 = scmp.ne.s32.totalorder %s249, %s250
      %p259 = scmp.eq.s32.totalorder %s29, 0
      %p260 = por %p258, %p259
      %p261 = scmp.ne.s32.totalorder %s249, %s250
      %p262 = scmp.eq.s32.totalorder %s30, 1
      %p263 = por %p261, %p262
      %p265 = scmp.ne.s32.totalorder %s250, %s264
      %p266 = scmp.eq.s32.totalorder %s30, 0
      %p267 = por %p265, %p266
      %s269 = sadd.s32 %s268, 1
      %p272 = scmp.eq.s32.totalorder %s24, 1
      %p273 = scmp.ne.s32.totalorder %s268, %s270
      %p274 = scmp.eq.s32.totalorder %s24, 0
      %p275 = por %p273, %p274
      %p276 = scmp.ne.s32.totalorder %s268, %s270
      %p277 = scmp.eq.s32.totalorder %s29, 1
      %p278 = por %p276, %p277
      %p279 = scmp.ne.s32.totalorder %s270, %s271
      %p280 = scmp.eq.s32.totalorder %s29, 0
      %p281 = por %p279, %p280
      %p282 = scmp.ne.s32.totalorder %s270, %s271
      %p283 = scmp.eq.s32.totalorder %s30, 1
      %p284 = por %p282, %p283
      %p286 = scmp.ne.s32.totalorder %s271, %s285
      %p287 = scmp.eq.s32.totalorder %s30, 0
      %p288 = por %p286, %p287
      %s290 = sadd.s32 %s289, 1
      %p293 = scmp.eq.s32.totalorder %s24, 1
      %p294 = scmp.ne.s32.totalorder %s289, %s291
      %p295 = scmp.eq.s32.totalorder %s24, 0
      %p296 = por %p294, %p295
      %p297 = scmp.ne.s32.totalorder %s289, %s291
      %p298 = scmp.eq.s32.totalorder %s29, 1
      %p299 = por %p297, %p298
      %p300 = scmp.ne.s32.totalorder %s291, %s292
      %p301 = scmp.eq.s32.totalorder %s29, 0
      %p302 = por %p300, %p301
      %p303 = scmp.ne.s32.totalorder %s291, %s292
      %p304 = scmp.eq.s32.totalorder %s30, 1
      %p305 = por %p303, %p304
      %p307 = scmp.ne.s32.totalorder %s292, %s306
      %p308 = scmp.eq.s32.totalorder %s30, 0
      %p309 = por %p307, %p308
      %s311 = sadd.s32 %s310, 1
      %p314 = scmp.eq.s32.totalorder %s24, 1
      %p315 = scmp.ne.s32.totalorder %s310, %s312
      %p316 = scmp.eq.s32.totalorder %s24, 0
      %p317 = por %p315, %p316
      %p318 = scmp.ne.s32.totalorder %s310, %s312
      %p319 = scmp.eq.s32.totalorder %s29, 1
      %p320 = por %p318, %p319
      %p321 = scmp.ne.s32.totalorder %s312, %s313
      %p322 = scmp.eq.s32.totalorder %s29, 0
      %p323 = por %p321, %p322
      %p324 = scmp.ne.s32.totalorder %s312, %s313
      %p325 = scmp.eq.s32.totalorder %s30, 1
      %p326 = por %p324, %p325
      %p328 = scmp.ne.s32.totalorder %s313, %s327
      %p329 = scmp.eq.s32.totalorder %s30, 0
      %p330 = por %p328, %p329
      %s332 = sadd.s32 %s331, 1
      %p335 = scmp.eq.s32.totalorder %s24, 1
      %p336 = scmp.ne.s32.totalorder %s331, %s333
      %p337 = scmp.eq.s32.totalorder %s24, 0
      %p338 = por %p336, %p337
      %p339 = scmp.ne.s32.totalorder %s331, %s333
      %p340 = scmp.eq.s32.totalorder %s29, 1
      %p341 = por %p339, %p340
      %p342 = scmp.ne.s32.totalorder %s333, %s334
      %p343 = scmp.eq.s32.totalorder %s29, 0
      %p344 = por %p342, %p343
      %p345 = scmp.ne.s32.totalorder %s333, %s334
      %p346 = scmp.eq.s32.totalorder %s30, 1
      %p347 = por %p345, %p346
      %p349 = scmp.ne.s32.totalorder %s334, %s348
      %p350 = scmp.eq.s32.totalorder %s30, 0
      %p351 = por %p349, %p350
      %s353 = sadd.s32 %s352, 1
      %p356 = scmp.eq.s32.totalorder %s24, 1
      %p357 = scmp.ne.s32.totalorder %s352, %s354
      %p358 = scmp.eq.s32.totalorder %s24, 0
      %p359 = por %p357, %p358
      %p360 = scmp.ne.s32.totalorder %s352, %s354
      %p361 = scmp.eq.s32.totalorder %s29, 1
      %p362 = por %p360, %p361
      %p363 = scmp.ne.s32.totalorder %s354, %s355
      %p364 = scmp.eq.s32.totalorder %s29, 0
      %p365 = por %p363, %p364
      %p366 = scmp.ne.s32.totalorder %s354, %s355
      %p367 = scmp.eq.s32.totalorder %s30, 1
      %p368 = por %p366, %p367
      %p370 = scmp.ne.s32.totalorder %s355, %s369
      %p371 = scmp.eq.s32.totalorder %s30, 0
      %p372 = por %p370, %p371
      %s374 = sadd.s32 %s373, 1
      %p377 = scmp.eq.s32.totalorder %s24, 1
      %p378 = scmp.ne.s32.totalorder %s373, %s375
      %p379 = scmp.eq.s32.totalorder %s24, 0
      %p380 = por %p378, %p379
      %p381 = scmp.ne.s32.totalorder %s373, %s375
      %p382 = scmp.eq.s32.totalorder %s29, 1
      %p383 = por %p381, %p382
      %p384 = scmp.ne.s32.totalorder %s375, %s376
      %p385 = scmp.eq.s32.totalorder %s29, 0
      %p386 = por %p384, %p385
      %p387 = scmp.ne.s32.totalorder %s375, %s376
      %p388 = scmp.eq.s32.totalorder %s30, 1
      %p389 = por %p387, %p388
      %p391 = scmp.ne.s32.totalorder %s376, %s390
      %p392 = scmp.eq.s32.totalorder %s30, 0
      %p393 = por %p391, %p392
      %s394 = ssub.s32 %s24, %s31
      %p395 = scmp.eq.s32.totalorder %s394, 0
      %s397 = sadd.s32 %s396, 1
      %s398 = scalar_select %p395, %s396, %s397
      %p401 = pneg %p395
      %p402 = scmp.eq.s32.totalorder %s24, 1
      %p403 = por %p401, %p402
      %p404 = scmp.ne.s32.totalorder %s396, %s399
      %p405 = scmp.eq.s32.totalorder %s24, 0
      %p406 = por %p404, %p405
      %p407 = scmp.ne.s32.totalorder %s396, %s399
      %p408 = scmp.eq.s32.totalorder %s29, 1
      %p409 = por %p407, %p408
      %p410 = scmp.ne.s32.totalorder %s399, %s400
      %p411 = scmp.eq.s32.totalorder %s29, 0
      %p412 = por %p410, %p411
      %p413 = scmp.ne.s32.totalorder %s399, %s400
      %p414 = scmp.eq.s32.totalorder %s30, 1
      %p415 = por %p413, %p414
      %p417 = scmp.ne.s32.totalorder %s400, %s416
      %p418 = scmp.eq.s32.totalorder %s30, 0
      %p419 = por %p417, %p418
      %p420 = scmp.le.s32.totalorder 1, %s24
      %p421 = scmp.lt.s32.totalorder %s24, 3
      %p422 = pnand %p420, %p421
      %p423 = pneg %p422
      // Predicated region
      $region9: #{trend_vae_decoder_forward.1} parent=5 // pred_check
        _
      $region10: #{trend_vae_decoder_forward.1} parent=5 // pred_check_branch
        %425 = sbr.rel (%p422) target = $region12
      $region11: #{trend_vae_decoder_forward.1} parent=5 // pred_region
        %s426 = ssub.s32 %s24, 1
        // Predicated region
        $region13: #{trend_vae_decoder_forward.1} parent=11 // pred_check
          %p427 = pneg %p45
        $region14: #{trend_vae_decoder_forward.1} parent=11 // pred_check_branch
          %429 = sbr.rel (%p427) target = $region16
        $region15: #{trend_vae_decoder_forward.1} parent=11 // pred_region
          %s431 = ssub.s32 32, 32
          %432 = vsyncadd [#allocation3], %s431
          %s434 = sshll.u32 %s0, 4
          %s435 = int_to_ptr.vmem [resolvable:$true] %s434
          %437 = dma.vmem_to_smem %s435, 32, [#allocation2], [#allocation3]
        $region16: #{trend_vae_decoder_forward.1} parent=11 // pred_fallthru
          _
        // Predicated region
        $region17: #{trend_vae_decoder_forward.1} parent=11 // pred_check
          %p438 = pneg %p92
        $region18: #{trend_vae_decoder_forward.1} parent=11 // pred_check_branch
          %440 = sbr.rel (%p438) target = $region20
        $region19: #{trend_vae_decoder_forward.1} parent=11 // pred_region
          _
        $region20: #{trend_vae_decoder_forward.1} parent=11 // pred_fallthru
          _
        // Predicated region
        $region21: #{trend_vae_decoder_forward.1} parent=11 // pred_check
          %p441 = pneg %p113
        $region22: #{trend_vae_decoder_forward.1} parent=11 // pred_check_branch
          %443 = sbr.rel (%p441) target = $region24
        $region23: #{trend_vae_decoder_forward.1} parent=11 // pred_region
          _
        $region24: #{trend_vae_decoder_forward.1} parent=11 // pred_fallthru
          _
        // Predicated region
        $region25: #{trend_vae_decoder_forward.1} parent=11 // pred_check
          %p444 = pneg %p134
        $region26: #{trend_vae_decoder_forward.1} parent=11 // pred_check_branch
          %446 = sbr.rel (%p444) target = $region28
        $region27: #{trend_vae_decoder_forward.1} parent=11 // pred_region
          _
        $region28: #{trend_vae_decoder_forward.1} parent=11 // pred_fallthru
          _
        // Predicated region
        $region29: #{trend_vae_decoder_forward.1} parent=11 // pred_check
          %p447 = pneg %p155
        $region30: #{trend_vae_decoder_forward.1} parent=11 // pred_check_branch
          %449 = sbr.rel (%p447) target = $region32
        $region31: #{trend_vae_decoder_forward.1} parent=11 // pred_region
          _
        $region32: #{trend_vae_decoder_forward.1} parent=11 // pred_fallthru
          _
        // Predicated region
        $region33: #{trend_vae_decoder_forward.1} parent=11 // pred_check
          %p450 = pneg %p176
        $region34: #{trend_vae_decoder_forward.1} parent=11 // pred_check_branch
          %452 = sbr.rel (%p450) target = $region36
        $region35: #{trend_vae_decoder_forward.1} parent=11 // pred_region
          _
        $region36: #{trend_vae_decoder_forward.1} parent=11 // pred_fallthru
          _
        // Predicated region
        $region37: #{trend_vae_decoder_forward.1} parent=11 // pred_check
          %p453 = pneg %p197
        $region38: #{trend_vae_decoder_forward.1} parent=11 // pred_check_branch
          %455 = sbr.rel (%p453) target = $region40
        $region39: #{trend_vae_decoder_forward.1} parent=11 // pred_region
          _
        $region40: #{trend_vae_decoder_forward.1} parent=11 // pred_fallthru
          _
        // Predicated region
        $region41: #{trend_vae_decoder_forward.1} parent=11 // pred_check
          %p456 = pneg %p218
        $region42: #{trend_vae_decoder_forward.1} parent=11 // pred_check_branch
          %458 = sbr.rel (%p456) target = $region44
        $region43: #{trend_vae_decoder_forward.1} parent=11 // pred_region
          _
        $region44: #{trend_vae_decoder_forward.1} parent=11 // pred_fallthru
          _
        // Predicated region
        $region45: #{trend_vae_decoder_forward.1} parent=11 // pred_check
          %p459 = pneg %p239
        $region46: #{trend_vae_decoder_forward.1} parent=11 // pred_check_branch
          %461 = sbr.rel (%p459) target = $region48
        $region47: #{trend_vae_decoder_forward.1} parent=11 // pred_region
          _
        $region48: #{trend_vae_decoder_forward.1} parent=11 // pred_fallthru
          _
        // Predicated region
        $region49: #{trend_vae_decoder_forward.1} parent=11 // pred_check
          %p462 = pneg %p260
        $region50: #{trend_vae_decoder_forward.1} parent=11 // pred_check_branch
          %464 = sbr.rel (%p462) target = $region52
        $region51: #{trend_vae_decoder_forward.1} parent=11 // pred_region
          _
        $region52: #{trend_vae_decoder_forward.1} parent=11 // pred_fallthru
          _
        // Predicated region
        $region53: #{trend_vae_decoder_forward.1} parent=11 // pred_check
          %p465 = pneg %p281
        $region54: #{trend_vae_decoder_forward.1} parent=11 // pred_check_branch
          %467 = sbr.rel (%p465) target = $region56
        $region55: #{trend_vae_decoder_forward.1} parent=11 // pred_region
          _
        $region56: #{trend_vae_decoder_forward.1} parent=11 // pred_fallthru
          _
        // Predicated region
        $region57: #{trend_vae_decoder_forward.1} parent=11 // pred_check
          %p468 = pneg %p302
        $region58: #{trend_vae_decoder_forward.1} parent=11 // pred_check_branch
          %470 = sbr.rel (%p468) target = $region60
        $region59: #{trend_vae_decoder_forward.1} parent=11 // pred_region
          _
        $region60: #{trend_vae_decoder_forward.1} parent=11 // pred_fallthru
          _
        // Predicated region
        $region61: #{trend_vae_decoder_forward.1} parent=11 // pred_check
          %p471 = pneg %p323
        $region62: #{trend_vae_decoder_forward.1} parent=11 // pred_check_branch
          %473 = sbr.rel (%p471) target = $region64
        $region63: #{trend_vae_decoder_forward.1} parent=11 // pred_region
          _
        $region64: #{trend_vae_decoder_forward.1} parent=11 // pred_fallthru
          _
        // Predicated region
        $region65: #{trend_vae_decoder_forward.1} parent=11 // pred_check
          %p474 = pneg %p344
        $region66: #{trend_vae_decoder_forward.1} parent=11 // pred_check_branch
          %476 = sbr.rel (%p474) target = $region68
        $region67: #{trend_vae_decoder_forward.1} parent=11 // pred_region
          _
        $region68: #{trend_vae_decoder_forward.1} parent=11 // pred_fallthru
          _
        // Predicated region
        $region69: #{trend_vae_decoder_forward.1} parent=11 // pred_check
          %p477 = pneg %p365
        $region70: #{trend_vae_decoder_forward.1} parent=11 // pred_check_branch
          %479 = sbr.rel (%p477) target = $region72
        $region71: #{trend_vae_decoder_forward.1} parent=11 // pred_region
          _
        $region72: #{trend_vae_decoder_forward.1} parent=11 // pred_fallthru
          _
        // Predicated region
        $region73: #{trend_vae_decoder_forward.1} parent=11 // pred_check
          %p480 = pneg %p386
        $region74: #{trend_vae_decoder_forward.1} parent=11 // pred_check_branch
          %482 = sbr.rel (%p480) target = $region76
        $region75: #{trend_vae_decoder_forward.1} parent=11 // pred_region
          _
        $region76: #{trend_vae_decoder_forward.1} parent=11 // pred_fallthru
          _
      $region12: #{trend_vae_decoder_forward.1} parent=5 // pred_fallthru
        _
      %p483 = scmp.lt.s32.totalorder %s24, 2
      // Predicated region
      $region77: #{trend_vae_decoder_forward.1} parent=5 // pred_check
        %p484 = pneg %p483
      $region78: #{trend_vae_decoder_forward.1} parent=5 // pred_check_branch
        %486 = sbr.rel (%p484) target = $region80
      $region79: #{trend_vae_decoder_forward.1} parent=5 // pred_region
        // Predicated region
        $region81: #{trend_vae_decoder_forward.1} parent=79 // pred_check
          %p487 = pneg %p65
        $region82: #{trend_vae_decoder_forward.1} parent=79 // pred_check_branch
          %489 = sbr.rel (%p487) target = $region84
        $region83: #{trend_vae_decoder_forward.1} parent=79 // pred_region
          %p490 = scmp.lt.s32.totalorder %s24, 1
          %s491 = scalar_select %p490, %s24, 1
          %s492 = scalar_lea.vmem %s1, %s491
        $region84: #{trend_vae_decoder_forward.1} parent=79 // pred_fallthru
          _
      $region80: #{trend_vae_decoder_forward.1} parent=5 // pred_fallthru
        _
      %p493 = scmp.le.s32.totalorder 1, %s24
      %p494 = scmp.lt.s32.totalorder %s24, 3
      %p495 = pnand %p493, %p494
      %p496 = pneg %p495
      // Predicated region
      $region85: #{trend_vae_decoder_forward.1} parent=5 // pred_check
        _
      $region86: #{trend_vae_decoder_forward.1} parent=5 // pred_check_branch
        %498 = sbr.rel (%p495) target = $region88
      $region87: #{trend_vae_decoder_forward.1} parent=5 // pred_region
        %s499 = ssub.s32 %s24, 1
        // Predicated region
        $region89: #{trend_vae_decoder_forward.1} parent=87 // pred_check
          %p500 = pneg %p45
        $region90: #{trend_vae_decoder_forward.1} parent=87 // pred_check_branch
          %502 = sbr.rel (%p500) target = $region92
        $region91: #{trend_vae_decoder_forward.1} parent=87 // pred_region
          %503 = dma.done [#allocation3], 32
        $region92: #{trend_vae_decoder_forward.1} parent=87 // pred_fallthru
          _
        %504 = sfence
        %p505 = pneg %p45
        %p506 = pneg %p42
        %p507 = scmp.lt.s32.totalorder %s29, 1
        %s508 = scalar_select %p507, %s29, 1
        %s509 = scalar_lea.vmem %s1, %s508
        %p510 = pneg %p71
        %p511 = pneg %p68
        %p512 = pneg %p92
        %p513 = pneg %p89
        %p514 = pneg %p113
        %p515 = pneg %p110
        %p516 = pneg %p134
        %p517 = pneg %p131
        %p518 = pneg %p155
        %p519 = pneg %p152
        %p520 = pneg %p176
        %p521 = pneg %p173
        %p522 = pneg %p197
        %p523 = pneg %p194
        %p524 = pneg %p218
        %p525 = pneg %p215
        %p526 = pneg %p239
        %p527 = pneg %p236
        %p528 = pneg %p260
        %p529 = pneg %p257
        %p530 = pneg %p281
        %p531 = pneg %p278
        %p532 = pneg %p302
        %p533 = pneg %p299
        %p534 = pneg %p323
        %p535 = pneg %p320
        %p536 = pneg %p344
        %p537 = pneg %p341
        %p538 = pneg %p365
        %p539 = pneg %p362
        %p540 = pneg %p386
        %p541 = pneg %p383
        %p542 = pneg %p412
        %p543 = pneg %p409
        %p544 = scmp.lt.s32.totalorder %s29, 1
        %s545 = scalar_select %p544, %s29, 1
        %s546 = smul.addr %s545, 2
        %s547 = smul.addr %s546, 8
        %s548 = scalar_lea.vmem %s17, %s547
        %p549 = scmp.lt.s32.totalorder %s29, 1
        %s550 = scalar_select %p549, %s29, 1
        %s551 = scalar_lea.vmem %s1, %s550
        %p552 = scmp.lt.s32.totalorder %s29, 1
        %s553 = scalar_select %p552, %s29, 1
        %s554 = smul.addr %s553, 2
        %s555 = smul.addr %s554, 8
        %s556 = scalar_lea.vmem %s17, %s555
        %v557 = vld [vmem:[%s551] sm:$0x1]
        %v558 = vld [vmem:[%s2] sm:$0xff]
        %v559 = vld [vmem:[%s3] sm:$0x1]
        %vm560 = vcmask 64512
        %v562 = vsel %vm560, %v557, 0
        %564 = vmatprep.subr.mxu0 0.0
        %565 = vmatpush1.msra.mxu0 %v558
        %566 = vmatprep.subr.mxu0 0.0
        %567 = vmatpush1.msra.mxu0 0.0
        %568 = vmatprep.subr.mxu0 0.0
        %569 = vmatpush1.msra.mxu0 0.0
        %570 = vmatprep.subr.mxu0 0.0
        %571 = vmatpush1.msra.mxu0 0.0
        %572 = vmatprep.subr.mxu0 0.0
        %573 = vmatpush1.msra.mxu0 0.0
        %574 = vmatprep.subr.mxu0 0.0
        %575 = vmatpush1.msra.mxu0 0.0
        %576 = vmatprep.subr.mxu0 0.0
        %577 = vmatpush1.msra.mxu0 0.0
        %578 = vmatprep.subr.mxu0 0.0
        %579 = vmatpush1.msra.mxu0 0.0
        %580 = vmatprep.subr.mxu0 0.0
        %581 = vmatpush1.msra.mxu0 0.0
        %582 = vmatprep.subr.mxu0 0.0
        %583 = vmatpush1.msra.mxu0 0.0
        %584 = vmatprep.subr.mxu0 0.0
        %585 = vmatpush1.msra.mxu0 0.0
        %586 = vmatprep.subr.mxu0 0.0
        %587 = vmatpush1.msra.mxu0 0.0
        %588 = vmatprep.subr.mxu0 0.0
        %589 = vmatpush1.msra.mxu0 0.0
        %590 = vmatprep.subr.mxu0 0.0
        %591 = vmatpush1.msra.mxu0 0.0
        %592 = vmatprep.subr.mxu0 0.0
        %593 = vmatpush1.msra.mxu0 0.0
        %594 = vmatprep.subr.mxu0 0.0
        %595 = vmatpush1.msra.mxu0 0.0
        %596 = vmatprep.subr.mxu0 0.0
        %597 = vmatpush1.msra.mxu0 0.0
        %598 = vmatprep.subr.mxu0 0.0
        %599 = vmatpush1.msra.mxu0 0.0
        %600 = vmatprep.subr.mxu0 0.0
        %601 = vmatpush1.msra.mxu0 0.0
        %602 = vmatprep.subr.mxu0 0.0
        %603 = vmatpush1.msra.mxu0 0.0
        %604 = vmatprep.subr.mxu0 0.0
        %605 = vmatpush1.msra.mxu0 0.0
        %606 = vmatprep.subr.mxu0 0.0
        %607 = vmatpush1.msra.mxu0 0.0
        %608 = vmatprep.subr.mxu0 0.0
        %609 = vmatpush1.msra.mxu0 0.0
        %610 = vmatprep.subr.mxu0 0.0
        %611 = vmatpush1.msra.mxu0 0.0
        %612 = vmatprep.subr.mxu0 0.0
        %613 = vmatpush1.msra.mxu0 0.0
        %614 = vmatprep.subr.mxu0 0.0
        %615 = vmatpush1.msra.mxu0 0.0
        %616 = vmatprep.subr.mxu0 0.0
        %617 = vmatpush1.msra.mxu0 0.0
        %618 = vmatprep.subr.mxu0 0.0
        %619 = vmatpush1.msra.mxu0 0.0
        %620 = vmatprep.subr.mxu0 0.0
        %621 = vmatpush1.msra.mxu0 0.0
        %622 = vmatprep.subr.mxu0 0.0
        %623 = vmatpush1.msra.mxu0 0.0
        %624 = vmatprep.subr.mxu0 0.0
        %625 = vmatpush1.msra.mxu0 0.0
        %626 = vmatprep.subr.mxu0 0.0
        %627 = vmatpush1.msra.mxu0 0.0
        %628 = vmatprep.mubr.f32.mxu0 0.0
        %629 = vmatmul.mubr.f32.gmra.mrb[0].mxu0 %v562
        %v630 = vpop.f32.mrb[0].mxu0
        %v631 = vadd.f32 %v559, %v630
        %v632 = vpop.f32.mrb[0].mxu0
        %633 = vdwg.mxu0
        %v634 = vmax.f32 %v631, 0.0
        %v635 = vld [vmem:[%s4] sm:$0xf]
        %v636 = vld [vmem:[%s5] sm:$0x1]
        %vm637 = vcmask 31744
        %v639 = vsel %vm637, %v634, 0
        %vm641 = vcmask 1043456
        %v643 = vsel %vm641, %v635, 0
        %645 = vmatprep.subr.mxu0 0.0
        %646 = vmatpush1.msra.mxu0 %v643
        %647 = vmatprep.subr.mxu0 0.0
        %648 = vmatpush1.msra.mxu0 0.0
        %649 = vmatprep.subr.mxu0 0.0
        %650 = vmatpush1.msra.mxu0 0.0
        %651 = vmatprep.subr.mxu0 0.0
        %652 = vmatpush1.msra.mxu0 0.0
        %653 = vmatprep.subr.mxu0 0.0
        %654 = vmatpush1.msra.mxu0 0.0
        %655 = vmatprep.subr.mxu0 0.0
        %656 = vmatpush1.msra.mxu0 0.0
        %657 = vmatprep.subr.mxu0 0.0
        %658 = vmatpush1.msra.mxu0 0.0
        %659 = vmatprep.subr.mxu0 0.0
        %660 = vmatpush1.msra.mxu0 0.0
        %661 = vmatprep.subr.mxu0 0.0
        %662 = vmatpush1.msra.mxu0 0.0
        %663 = vmatprep.subr.mxu0 0.0
        %664 = vmatpush1.msra.mxu0 0.0
        %665 = vmatprep.subr.mxu0 0.0
        %666 = vmatpush1.msra.mxu0 0.0
        %667 = vmatprep.subr.mxu0 0.0
        %668 = vmatpush1.msra.mxu0 0.0
        %669 = vmatprep.subr.mxu0 0.0
        %670 = vmatpush1.msra.mxu0 0.0
        %671 = vmatprep.subr.mxu0 0.0
        %672 = vmatpush1.msra.mxu0 0.0
        %673 = vmatprep.subr.mxu0 0.0
        %674 = vmatpush1.msra.mxu0 0.0
        %675 = vmatprep.subr.mxu0 0.0
        %676 = vmatpush1.msra.mxu0 0.0
        %677 = vmatprep.subr.mxu0 0.0
        %678 = vmatpush1.msra.mxu0 0.0
        %679 = vmatprep.subr.mxu0 0.0
        %680 = vmatpush1.msra.mxu0 0.0
        %681 = vmatprep.subr.mxu0 0.0
        %682 = vmatpush1.msra.mxu0 0.0
        %683 = vmatprep.subr.mxu0 0.0
        %684 = vmatpush1.msra.mxu0 0.0
        %685 = vmatprep.subr.mxu0 0.0
        %686 = vmatpush1.msra.mxu0 0.0
        %687 = vmatprep.subr.mxu0 0.0
        %688 = vmatpush1.msra.mxu0 0.0
        %689 = vmatprep.subr.mxu0 0.0
        %690 = vmatpush1.msra.mxu0 0.0
        %691 = vmatprep.subr.mxu0 0.0
        %692 = vmatpush1.msra.mxu0 0.0
        %693 = vmatprep.subr.mxu0 0.0
        %694 = vmatpush1.msra.mxu0 0.0
        %695 = vmatprep.subr.mxu0 0.0
        %696 = vmatpush1.msra.mxu0 0.0
        %697 = vmatprep.subr.mxu0 0.0
        %698 = vmatpush1.msra.mxu0 0.0
        %699 = vmatprep.subr.mxu0 0.0
        %700 = vmatpush1.msra.mxu0 0.0
        %701 = vmatprep.subr.mxu0 0.0
        %702 = vmatpush1.msra.mxu0 0.0
        %703 = vmatprep.subr.mxu0 0.0
        %704 = vmatpush1.msra.mxu0 0.0
        %705 = vmatprep.subr.mxu0 0.0
        %706 = vmatpush1.msra.mxu0 0.0
        %707 = vmatprep.subr.mxu0 0.0
        %708 = vmatpush1.msra.mxu0 0.0
        %709 = vmatprep.mubr.f32.mxu0 0.0
        %710 = vmatmul.mubr.f32.gmra.mrb[0].mxu0 %v639
        %v711 = vpop.f32.mrb[0].mxu0
        %v712 = vadd.f32 %v636, %v711
        %v713 = vpop.f32.mrb[0].mxu0
        %714 = vdwg.mxu0
        %v715 = vld [vmem:[%s6] sm:$0xff]
        %v716 = vld [vmem:[%s7] sm:$0x1]
        %717 = vrot.lane.b32.xlu0 %v634, 124
        %v718 = vpop.permute.xlu0 %717
        %v719 = vsel %vm560, %v718, 0
        %721 = vmatprep.subr.mxu0 0.0
        %722 = vmatpush1.msra.mxu0 %v715
        %723 = vmatprep.subr.mxu0 0.0
        %724 = vmatpush1.msra.mxu0 0.0
        %725 = vmatprep.subr.mxu0 0.0
        %726 = vmatpush1.msra.mxu0 0.0
        %727 = vmatprep.subr.mxu0 0.0
        %728 = vmatpush1.msra.mxu0 0.0
        %729 = vmatprep.subr.mxu0 0.0
        %730 = vmatpush1.msra.mxu0 0.0
        %731 = vmatprep.subr.mxu0 0.0
        %732 = vmatpush1.msra.mxu0 0.0
        %733 = vmatprep.subr.mxu0 0.0
        %734 = vmatpush1.msra.mxu0 0.0
        %735 = vmatprep.subr.mxu0 0.0
        %736 = vmatpush1.msra.mxu0 0.0
        %737 = vmatprep.subr.mxu0 0.0
        %738 = vmatpush1.msra.mxu0 0.0
        %739 = vmatprep.subr.mxu0 0.0
        %740 = vmatpush1.msra.mxu0 0.0
        %741 = vmatprep.subr.mxu0 0.0
        %742 = vmatpush1.msra.mxu0 0.0
        %743 = vmatprep.subr.mxu0 0.0
        %744 = vmatpush1.msra.mxu0 0.0
        %745 = vmatprep.subr.mxu0 0.0
        %746 = vmatpush1.msra.mxu0 0.0
        %747 = vmatprep.subr.mxu0 0.0
        %748 = vmatpush1.msra.mxu0 0.0
        %749 = vmatprep.subr.mxu0 0.0
        %750 = vmatpush1.msra.mxu0 0.0
        %751 = vmatprep.subr.mxu0 0.0
        %752 = vmatpush1.msra.mxu0 0.0
        %753 = vmatprep.subr.mxu0 0.0
        %754 = vmatpush1.msra.mxu0 0.0
        %755 = vmatprep.subr.mxu0 0.0
        %756 = vmatpush1.msra.mxu0 0.0
        %757 = vmatprep.subr.mxu0 0.0
        %758 = vmatpush1.msra.mxu0 0.0
        %759 = vmatprep.subr.mxu0 0.0
        %760 = vmatpush1.msra.mxu0 0.0
        %761 = vmatprep.subr.mxu0 0.0
        %762 = vmatpush1.msra.mxu0 0.0
        %763 = vmatprep.subr.mxu0 0.0
        %764 = vmatpush1.msra.mxu0 0.0
        %765 = vmatprep.subr.mxu0 0.0
        %766 = vmatpush1.msra.mxu0 0.0
        %767 = vmatprep.subr.mxu0 0.0
        %768 = vmatpush1.msra.mxu0 0.0
        %769 = vmatprep.subr.mxu0 0.0
        %770 = vmatpush1.msra.mxu0 0.0
        %771 = vmatprep.subr.mxu0 0.0
        %772 = vmatpush1.msra.mxu0 0.0
        %773 = vmatprep.subr.mxu0 0.0
        %774 = vmatpush1.msra.mxu0 0.0
        %775 = vmatprep.subr.mxu0 0.0
        %776 = vmatpush1.msra.mxu0 0.0
        %777 = vmatprep.subr.mxu0 0.0
        %778 = vmatpush1.msra.mxu0 0.0
        %779 = vmatprep.subr.mxu0 0.0
        %780 = vmatpush1.msra.mxu0 0.0
        %781 = vmatprep.subr.mxu0 0.0
        %782 = vmatpush1.msra.mxu0 0.0
        %783 = vmatprep.subr.mxu0 0.0
        %784 = vmatpush1.msra.mxu0 0.0
        %785 = vmatprep.mubr.f32.mxu0 0.0
        %786 = vmatmul.mubr.f32.gmra.mrb[0].mxu0 %v719
        %v787 = vpop.f32.mrb[0].mxu0
        %v788 = vadd.f32 %v716, %v787
        %v789 = vpop.f32.mrb[0].mxu0
        %790 = vdwg.mxu0
        %v791 = vld [vmem:[%s8] sm:$0xff]
        %v792 = vld [vmem:[%s8 + $0x8] sm:$0xff]
        %794 = vset.pattern.permute.xlu0 0
        %795 = vperm.xlu0 %794, %v791
        %v796 = vpop.permute.xlu0 %795
        %799 = vset.pattern.permute.xlu0 0
        %800 = vperm.xlu0 %799, %v792
        %v801 = vpop.permute.xlu0 %800
        %v803 = vlaneseq
        %v804 = vshrl.u32 %v803, 7
        %v805 = vsub.s32 0, %v804
        %v806 = vrot.slane %v788, %v805
        %v807 = vmul.f32 %v796, %v806
        %v808 = vmul.f32 %v801, %v806
        %v809 = vadd.f32 %v807, 0.0
        %v810 = vadd.f32 %v808, 0.0
        %811 = vset.pattern.permute.xlu0 1
        %812 = vperm.xlu0 %811, %v791
        %v813 = vpop.permute.xlu0 %812
        %815 = vset.pattern.permute.xlu0 1
        %816 = vperm.xlu0 %815, %v792
        %v817 = vpop.permute.xlu0 %816
        %v819 = vmul.f32 %v813, %v806
        %v820 = vmul.f32 %v817, %v806
        %823 = vrot.lane.b32.xlu0 %v819, 124
        %v824 = vpop.permute.xlu0 %823
        %825 = vrot.lane.b32.xlu0 %v820, 124
        %v826 = vpop.permute.xlu0 %825
        %v829 = vadd.f32 %v809, %v824
        %v830 = vadd.f32 %v810, %v826
        %v831 = vld [vmem:[%s10] sm:$0xff]
        %v832 = vld [vmem:[%s10 + $0x8] sm:$0xff]
        %s833 = smul.u32 %s29, 128
        %s834 = sld [smem:[#allocation2 + %s833]]
        %v835 = vld [vmem:[%s9] sm:$0xff]
        %v836 = vld [vmem:[%s9 + $0x8] sm:$0xff]
        %v837 = vstv %s834
        %v838 = vmul.f32 %v837, %v835
        %v839 = vmul.f32 %v837, %v836
        %v840 = vadd.f32 %v831, %v838
        %v841 = vadd.f32 %v832, %v839
        %s842 = sadd.s32 %s833, 1
        %s843 = sld [smem:[#allocation2 + %s842]]
        %s844 = scalar_lea.vmem %s9, 16
        %v845 = vld [vmem:[%s844] sm:$0xff]
        %v846 = vld [vmem:[%s844 + $0x8] sm:$0xff]
        %v847 = vstv %s843
        %v848 = vmul.f32 %v847, %v845
        %v849 = vmul.f32 %v847, %v846
        %v850 = vadd.f32 %v840, %v848
        %v851 = vadd.f32 %v841, %v849
        %s852 = sadd.s32 %s833, 2
        %s853 = sld [smem:[#allocation2 + %s852]]
        %s854 = scalar_lea.vmem %s9, 32
        %v855 = vld [vmem:[%s854] sm:$0xff]
        %v856 = vld [vmem:[%s854 + $0x8] sm:$0xff]
        %v857 = vstv %s853
        %v858 = vmul.f32 %v857, %v855
        %v859 = vmul.f32 %v857, %v856
        %v860 = vadd.f32 %v850, %v858
        %v861 = vadd.f32 %v851, %v859
        %s862 = sadd.s32 %s833, 3
        %s863 = sld [smem:[#allocation2 + %s862]]
        %s864 = scalar_lea.vmem %s9, 48
        %v865 = vld [vmem:[%s864] sm:$0xff]
        %v866 = vld [vmem:[%s864 + $0x8] sm:$0xff]
        %v867 = vstv %s863
        %v868 = vmul.f32 %v867, %v865
        %v869 = vmul.f32 %v867, %v866
        %v870 = vadd.f32 %v860, %v868
        %v871 = vadd.f32 %v861, %v869
        %s872 = sadd.s32 %s833, 4
        %s873 = sld [smem:[#allocation2 + %s872]]
        %s874 = scalar_lea.vmem %s9, 64
        %v875 = vld [vmem:[%s874] sm:$0xff]
        %v876 = vld [vmem:[%s874 + $0x8] sm:$0xff]
        %v877 = vstv %s873
        %v878 = vmul.f32 %v877, %v875
        %v879 = vmul.f32 %v877, %v876
        %v880 = vadd.f32 %v870, %v878
        %v881 = vadd.f32 %v871, %v879
        %s882 = sadd.s32 %s833, 5
        %s883 = sld [smem:[#allocation2 + %s882]]
        %s884 = scalar_lea.vmem %s9, 80
        %v885 = vld [vmem:[%s884] sm:$0xff]
        %v886 = vld [vmem:[%s884 + $0x8] sm:$0xff]
        %v887 = vstv %s883
        %v888 = vmul.f32 %v887, %v885
        %v889 = vmul.f32 %v887, %v886
        %v890 = vadd.f32 %v880, %v888
        %v891 = vadd.f32 %v881, %v889
        %s892 = sadd.s32 %s833, 6
        %s893 = sld [smem:[#allocation2 + %s892]]
        %s894 = scalar_lea.vmem %s9, 96
        %v895 = vld [vmem:[%s894] sm:$0xff]
        %v896 = vld [vmem:[%s894 + $0x8] sm:$0xff]
        %v897 = vstv %s893
        %v898 = vmul.f32 %v897, %v895
        %v899 = vmul.f32 %v897, %v896
        %v900 = vadd.f32 %v890, %v898
        %v901 = vadd.f32 %v891, %v899
        %s902 = sadd.s32 %s833, 7
        %s903 = sld [smem:[#allocation2 + %s902]]
        %s904 = scalar_lea.vmem %s9, 112
        %v905 = vld [vmem:[%s904] sm:$0xff]
        %v906 = vld [vmem:[%s904 + $0x8] sm:$0xff]
        %v907 = vstv %s903
        %v908 = vmul.f32 %v907, %v905
        %v909 = vmul.f32 %v907, %v906
        %v910 = vadd.f32 %v900, %v908
        %v911 = vadd.f32 %v901, %v909
        %v912 = vlaneseq
        %v913 = vshrl.u32 %v912, 7
        %v914 = vadd.s32 %v913, 8
        %v915 = vlaneseq
        %v916 = vand.u32 %v915, 127
        %v917 = vadd.s32 %v916, 1
        %vm918 = vcmp.eq.s32.totalorder %v913, %v917
        %vm919 = vcmp.eq.s32.totalorder %v914, %v917
        %v920 = vsel %vm918, 1, 0
        %v921 = vsel %vm919, 1, 0
        %v922 = vcvt.s32.f32 %v920
        %v923 = vcvt.s32.f32 %v921
        %v924 = vadd.s32 %v913, 1
        %v925 = vadd.s32 %v914, 1
        %vm926 = vcmp.eq.s32.totalorder %v924, %v916
        %vm927 = vcmp.eq.s32.totalorder %v925, %v916
        %v928 = vsel %vm926, 1, 0
        %v929 = vsel %vm927, 1, 0
        %v930 = vcvt.s32.f32 %v928
        %v931 = vcvt.s32.f32 %v929
        %v932 = vlaneseq
        %v933 = vshrl.u32 %v932, 7
        %v934 = vsub.s32 0, %v933
        %v935 = vrot.slane %v557, %v934
        %v937 = vld [vmem:[%s11] sm:$0xff]
        %v938 = vld [vmem:[%s11 + $0x8] sm:$0xff]
        %v939 = vld [vmem:[%s11 + $0x10] sm:$0xff]
        %v940 = vld [vmem:[%s12] sm:$0x1]
        %vm941 = vcmask 130048
        %v943 = vsel %vm941, %v922, 0
        %v946 = vsel %vm941, %v923, 0
        %948 = vmatprep.subr.mxu0 0.0
        %949 = vmatpush1.msra.mxu0 %v935
        %950 = vmatprep.subr.mxu0 0.0
        %951 = vmatpush1.msra.mxu0 %v935
        %952 = vmatprep.subr.mxu0 0.0
        %953 = vmatpush1.msra.mxu0 0.0
        %954 = vmatprep.subr.mxu0 0.0
        %955 = vmatpush1.msra.mxu0 0.0
        %956 = vmatprep.subr.mxu0 0.0
        %957 = vmatpush1.msra.mxu0 0.0
        %958 = vmatprep.subr.mxu0 0.0
        %959 = vmatpush1.msra.mxu0 0.0
        %960 = vmatprep.subr.mxu0 0.0
        %961 = vmatpush1.msra.mxu0 0.0
        %962 = vmatprep.subr.mxu0 0.0
        %963 = vmatpush1.msra.mxu0 0.0
        %964 = vmatprep.subr.mxu0 0.0
        %965 = vmatpush1.msra.mxu0 0.0
        %966 = vmatprep.subr.mxu0 0.0
        %967 = vmatpush1.msra.mxu0 0.0
        %968 = vmatprep.subr.mxu0 0.0
        %969 = vmatpush1.msra.mxu0 0.0
        %970 = vmatprep.subr.mxu0 0.0
        %971 = vmatpush1.msra.mxu0 0.0
        %972 = vmatprep.subr.mxu0 0.0
        %973 = vmatpush1.msra.mxu0 0.0
        %974 = vmatprep.subr.mxu0 0.0
        %975 = vmatpush1.msra.mxu0 0.0
        %976 = vmatprep.subr.mxu0 0.0
        %977 = vmatpush1.msra.mxu0 0.0
        %978 = vmatprep.subr.mxu0 0.0
        %979 = vmatpush1.msra.mxu0 0.0
        %980 = vmatprep.subr.mxu0 0.0
        %981 = vmatpush1.msra.mxu0 0.0
        %982 = vmatprep.subr.mxu0 0.0
        %983 = vmatpush1.msra.mxu0 0.0
        %984 = vmatprep.subr.mxu0 0.0
        %985 = vmatpush1.msra.mxu0 0.0
        %986 = vmatprep.subr.mxu0 0.0
        %987 = vmatpush1.msra.mxu0 0.0
        %988 = vmatprep.subr.mxu0 0.0
        %989 = vmatpush1.msra.mxu0 0.0
        %990 = vmatprep.subr.mxu0 0.0
        %991 = vmatpush1.msra.mxu0 0.0
        %992 = vmatprep.subr.mxu0 0.0
        %993 = vmatpush1.msra.mxu0 0.0
        %994 = vmatprep.subr.mxu0 0.0
        %995 = vmatpush1.msra.mxu0 0.0
        %996 = vmatprep.subr.mxu0 0.0
        %997 = vmatpush1.msra.mxu0 0.0
        %998 = vmatprep.subr.mxu0 0.0
        %999 = vmatpush1.msra.mxu0 0.0
        %1000 = vmatprep.subr.mxu0 0.0
        %1001 = vmatpush1.msra.mxu0 0.0
        %1002 = vmatprep.subr.mxu0 0.0
        %1003 = vmatpush1.msra.mxu0 0.0
        %1004 = vmatprep.subr.mxu0 0.0
        %1005 = vmatpush1.msra.mxu0 0.0
        %1006 = vmatprep.subr.mxu0 0.0
        %1007 = vmatpush1.msra.mxu0 0.0
        %1008 = vmatprep.subr.mxu0 0.0
        %1009 = vmatpush1.msra.mxu0 0.0
        %1010 = vmatprep.subr.mxu0 0.0
        %1011 = vmatpush1.msra.mxu0 0.0
        %1012 = vmatprep.mubr.f32.mxu0 0.0
        %1013 = vmatmul.mubr.f32.gmra.mrb[0].mxu0 %v943
        %v1014 = vpop.f32.mrb[0].mxu0
        %v1015 = vadd.f32 0.0, %v1014
        %v1016 = vpop.f32.mrb[0].mxu0
        %1017 = vmatprep.mubr.f32.mxu0 0.0
        %1018 = vmatmul.mubr.f32.gmra.mrb[0].mxu0 %v946
        %v1019 = vpop.f32.mrb[0].mxu0
        %v1020 = vadd.f32 0.0, %v1019
        %v1021 = vpop.f32.mrb[0].mxu0
        %1022 = vdwg.mxu0
        %v1024 = vsel %vm941, %v930, 0
        %v1027 = vsel %vm941, %v931, 0
        %1029 = vmatprep.subr.mxu0 0.0
        %1030 = vmatpush1.msra.mxu0 %v935
        %1031 = vmatprep.subr.mxu0 0.0
        %1032 = vmatpush1.msra.mxu0 %v935
        %1033 = vmatprep.subr.mxu0 0.0
        %1034 = vmatpush1.msra.mxu0 0.0
        %1035 = vmatprep.subr.mxu0 0.0
        %1036 = vmatpush1.msra.mxu0 0.0
        %1037 = vmatprep.subr.mxu0 0.0
        %1038 = vmatpush1.msra.mxu0 0.0
        %1039 = vmatprep.subr.mxu0 0.0
        %1040 = vmatpush1.msra.mxu0 0.0
        %1041 = vmatprep.subr.mxu0 0.0
        %1042 = vmatpush1.msra.mxu0 0.0
        %1043 = vmatprep.subr.mxu0 0.0
        %1044 = vmatpush1.msra.mxu0 0.0
        %1045 = vmatprep.subr.mxu0 0.0
        %1046 = vmatpush1.msra.mxu0 0.0
        %1047 = vmatprep.subr.mxu0 0.0
        %1048 = vmatpush1.msra.mxu0 0.0
        %1049 = vmatprep.subr.mxu0 0.0
        %1050 = vmatpush1.msra.mxu0 0.0
        %1051 = vmatprep.subr.mxu0 0.0
        %1052 = vmatpush1.msra.mxu0 0.0
        %1053 = vmatprep.subr.mxu0 0.0
        %1054 = vmatpush1.msra.mxu0 0.0
        %1055 = vmatprep.subr.mxu0 0.0
        %1056 = vmatpush1.msra.mxu0 0.0
        %1057 = vmatprep.subr.mxu0 0.0
        %1058 = vmatpush1.msra.mxu0 0.0
        %1059 = vmatprep.subr.mxu0 0.0
        %1060 = vmatpush1.msra.mxu0 0.0
        %1061 = vmatprep.subr.mxu0 0.0
        %1062 = vmatpush1.msra.mxu0 0.0
        %1063 = vmatprep.subr.mxu0 0.0
        %1064 = vmatpush1.msra.mxu0 0.0
        %1065 = vmatprep.subr.mxu0 0.0
        %1066 = vmatpush1.msra.mxu0 0.0
        %1067 = vmatprep.subr.mxu0 0.0
        %1068 = vmatpush1.msra.mxu0 0.0
        %1069 = vmatprep.subr.mxu0 0.0
        %1070 = vmatpush1.msra.mxu0 0.0
        %1071 = vmatprep.subr.mxu0 0.0
        %1072 = vmatpush1.msra.mxu0 0.0
        %1073 = vmatprep.subr.mxu0 0.0
        %1074 = vmatpush1.msra.mxu0 0.0
        %1075 = vmatprep.subr.mxu0 0.0
        %1076 = vmatpush1.msra.mxu0 0.0
        %1077 = vmatprep.subr.mxu0 0.0
        %1078 = vmatpush1.msra.mxu0 0.0
        %1079 = vmatprep.subr.mxu0 0.0
        %1080 = vmatpush1.msra.mxu0 0.0
        %1081 = vmatprep.subr.mxu0 0.0
        %1082 = vmatpush1.msra.mxu0 0.0
        %1083 = vmatprep.subr.mxu0 0.0
        %1084 = vmatpush1.msra.mxu0 0.0
        %1085 = vmatprep.subr.mxu0 0.0
        %1086 = vmatpush1.msra.mxu0 0.0
        %1087 = vmatprep.subr.mxu0 0.0
        %1088 = vmatpush1.msra.mxu0 0.0
        %1089 = vmatprep.subr.mxu0 0.0
        %1090 = vmatpush1.msra.mxu0 0.0
        %1091 = vmatprep.subr.mxu0 0.0
        %1092 = vmatpush1.msra.mxu0 0.0
        %1093 = vmatprep.mubr.f32.mxu0 0.0
        %1094 = vmatmul.mubr.f32.gmra.mrb[0].mxu0 %v1024
        %v1095 = vpop.f32.mrb[0].mxu0
        %v1096 = vadd.f32 0.0, %v1095
        %v1097 = vpop.f32.mrb[0].mxu0
        %1098 = vmatprep.mubr.f32.mxu0 0.0
        %1099 = vmatmul.mubr.f32.gmra.mrb[0].mxu0 %v1027
        %v1100 = vpop.f32.mrb[0].mxu0
        %v1101 = vadd.f32 0.0, %v1100
        %v1102 = vpop.f32.mrb[0].mxu0
        %1103 = vdwg.mxu0
        %v1104 = vsel %vm560, %v935, 0
        %1106 = vmatprep.subr.mxu0 0.0
        %1107 = vmatpush1.msra.mxu0 %v938
        %1108 = vmatprep.subr.mxu0 0.0
        %1109 = vmatpush1.msra.mxu0 0.0
        %1110 = vmatprep.subr.mxu0 0.0
        %1111 = vmatpush1.msra.mxu0 0.0
        %1112 = vmatprep.subr.mxu0 0.0
        %1113 = vmatpush1.msra.mxu0 0.0
        %1114 = vmatprep.subr.mxu0 0.0
        %1115 = vmatpush1.msra.mxu0 0.0
        %1116 = vmatprep.subr.mxu0 0.0
        %1117 = vmatpush1.msra.mxu0 0.0
        %1118 = vmatprep.subr.mxu0 0.0
        %1119 = vmatpush1.msra.mxu0 0.0
        %1120 = vmatprep.subr.mxu0 0.0
        %1121 = vmatpush1.msra.mxu0 0.0
        %1122 = vmatprep.subr.mxu0 0.0
        %1123 = vmatpush1.msra.mxu0 0.0
        %1124 = vmatprep.subr.mxu0 0.0
        %1125 = vmatpush1.msra.mxu0 0.0
        %1126 = vmatprep.subr.mxu0 0.0
        %1127 = vmatpush1.msra.mxu0 0.0
        %1128 = vmatprep.subr.mxu0 0.0
        %1129 = vmatpush1.msra.mxu0 0.0
        %1130 = vmatprep.subr.mxu0 0.0
        %1131 = vmatpush1.msra.mxu0 0.0
        %1132 = vmatprep.subr.mxu0 0.0
        %1133 = vmatpush1.msra.mxu0 0.0
        %1134 = vmatprep.subr.mxu0 0.0
        %1135 = vmatpush1.msra.mxu0 0.0
        %1136 = vmatprep.subr.mxu0 0.0
        %1137 = vmatpush1.msra.mxu0 0.0
        %1138 = vmatprep.subr.mxu0 0.0
        %1139 = vmatpush1.msra.mxu0 0.0
        %1140 = vmatprep.subr.mxu0 0.0
        %1141 = vmatpush1.msra.mxu0 0.0
        %1142 = vmatprep.subr.mxu0 0.0
        %1143 = vmatpush1.msra.mxu0 0.0
        %1144 = vmatprep.subr.mxu0 0.0
        %1145 = vmatpush1.msra.mxu0 0.0
        %1146 = vmatprep.subr.mxu0 0.0
        %1147 = vmatpush1.msra.mxu0 0.0
        %1148 = vmatprep.subr.mxu0 0.0
        %1149 = vmatpush1.msra.mxu0 0.0
        %1150 = vmatprep.subr.mxu0 0.0
        %1151 = vmatpush1.msra.mxu0 0.0
        %1152 = vmatprep.subr.mxu0 0.0
        %1153 = vmatpush1.msra.mxu0 0.0
        %1154 = vmatprep.subr.mxu0 0.0
        %1155 = vmatpush1.msra.mxu0 0.0
        %1156 = vmatprep.subr.mxu0 0.0
        %1157 = vmatpush1.msra.mxu0 0.0
        %1158 = vmatprep.subr.mxu0 0.0
        %1159 = vmatpush1.msra.mxu0 0.0
        %1160 = vmatprep.subr.mxu0 0.0
        %1161 = vmatpush1.msra.mxu0 0.0
        %1162 = vmatprep.subr.mxu0 0.0
        %1163 = vmatpush1.msra.mxu0 0.0
        %1164 = vmatprep.subr.mxu0 0.0
        %1165 = vmatpush1.msra.mxu0 0.0
        %1166 = vmatprep.subr.mxu0 0.0
        %1167 = vmatpush1.msra.mxu0 0.0
        %1168 = vmatprep.subr.mxu0 0.0
        %1169 = vmatpush1.msra.mxu0 0.0
        %1170 = vmatprep.mubr.f32.mxu0 0.0
        %1171 = vmatmul.mubr.f32.gmra.mrb[0].mxu0 %v1104
        %v1172 = vpop.f32.mrb[0].mxu0
        %v1173 = vadd.f32 0.0, %v1172
        %v1174 = vpop.f32.mrb[0].mxu0
        %1175 = vmatprep.mubr.f32.mxu0 0.0
        %1176 = vmatmul.mubr.f32.gmra.mrb[0].mxu0 %v1104
        %v1177 = vpop.f32.mrb[0].mxu0
        %v1178 = vadd.f32 0.0, %v1177
        %v1179 = vpop.f32.mrb[0].mxu0
        %1180 = vdwg.mxu0
        %v1182 = vsel %vm560, %v1015, 0
        %v1185 = vsel %vm560, %v1020, 0
        %1187 = vmatprep.subr.mxu0 0.0
        %1188 = vmatpush1.msra.mxu0 %v937
        %1189 = vmatprep.subr.mxu0 0.0
        %1190 = vmatpush1.msra.mxu0 0.0
        %1191 = vmatprep.subr.mxu0 0.0
        %1192 = vmatpush1.msra.mxu0 0.0
        %1193 = vmatprep.subr.mxu0 0.0
        %1194 = vmatpush1.msra.mxu0 0.0
        %1195 = vmatprep.subr.mxu0 0.0
        %1196 = vmatpush1.msra.mxu0 0.0
        %1197 = vmatprep.subr.mxu0 0.0
        %1198 = vmatpush1.msra.mxu0 0.0
        %1199 = vmatprep.subr.mxu0 0.0
        %1200 = vmatpush1.msra.mxu0 0.0
        %1201 = vmatprep.subr.mxu0 0.0
        %1202 = vmatpush1.msra.mxu0 0.0
        %1203 = vmatprep.subr.mxu0 0.0
        %1204 = vmatpush1.msra.mxu0 0.0
        %1205 = vmatprep.subr.mxu0 0.0
        %1206 = vmatpush1.msra.mxu0 0.0
        %1207 = vmatprep.subr.mxu0 0.0
        %1208 = vmatpush1.msra.mxu0 0.0
        %1209 = vmatprep.subr.mxu0 0.0
        %1210 = vmatpush1.msra.mxu0 0.0
        %1211 = vmatprep.subr.mxu0 0.0
        %1212 = vmatpush1.msra.mxu0 0.0
        %1213 = vmatprep.subr.mxu0 0.0
        %1214 = vmatpush1.msra.mxu0 0.0
        %1215 = vmatprep.subr.mxu0 0.0
        %1216 = vmatpush1.msra.mxu0 0.0
        %1217 = vmatprep.subr.mxu0 0.0
        %1218 = vmatpush1.msra.mxu0 0.0
        %1219 = vmatprep.subr.mxu0 0.0
        %1220 = vmatpush1.msra.mxu0 0.0
        %1221 = vmatprep.subr.mxu0 0.0
        %1222 = vmatpush1.msra.mxu0 0.0
        %1223 = vmatprep.subr.mxu0 0.0
        %1224 = vmatpush1.msra.mxu0 0.0
        %1225 = vmatprep.subr.mxu0 0.0
        %1226 = vmatpush1.msra.mxu0 0.0
        %1227 = vmatprep.subr.mxu0 0.0
        %1228 = vmatpush1.msra.mxu0 0.0
        %1229 = vmatprep.subr.mxu0 0.0
        %1230 = vmatpush1.msra.mxu0 0.0
        %1231 = vmatprep.subr.mxu0 0.0
        %1232 = vmatpush1.msra.mxu0 0.0
        %1233 = vmatprep.subr.mxu0 0.0
        %1234 = vmatpush1.msra.mxu0 0.0
        %1235 = vmatprep.subr.mxu0 0.0
        %1236 = vmatpush1.msra.mxu0 0.0
        %1237 = vmatprep.subr.mxu0 0.0
        %1238 = vmatpush1.msra.mxu0 0.0
        %1239 = vmatprep.subr.mxu0 0.0
        %1240 = vmatpush1.msra.mxu0 0.0
        %1241 = vmatprep.subr.mxu0 0.0
        %1242 = vmatpush1.msra.mxu0 0.0
        %1243 = vmatprep.subr.mxu0 0.0
        %1244 = vmatpush1.msra.mxu0 0.0
        %1245 = vmatprep.subr.mxu0 0.0
        %1246 = vmatpush1.msra.mxu0 0.0
        %1247 = vmatprep.subr.mxu0 0.0
        %1248 = vmatpush1.msra.mxu0 0.0
        %1249 = vmatprep.subr.mxu0 0.0
        %1250 = vmatpush1.msra.mxu0 0.0
        %1251 = vmatprep.mubr.f32.mxu0 0.0
        %1252 = vmatmul.mubr.f32.gmra.mrb[0].mxu0 %v1182
        %v1253 = vpop.f32.mrb[0].mxu0
        %v1254 = vadd.f32 %v1173, %v1253
        %v1255 = vpop.f32.mrb[0].mxu0
        %1256 = vmatprep.mubr.f32.mxu0 0.0
        %1257 = vmatmul.mubr.f32.gmra.mrb[0].mxu0 %v1185
        %v1258 = vpop.f32.mrb[0].mxu0
        %v1259 = vadd.f32 %v1178, %v1258
        %v1260 = vpop.f32.mrb[0].mxu0
        %1261 = vdwg.mxu0
        %v1263 = vsel %vm560, %v1096, 0
        %v1266 = vsel %vm560, %v1101, 0
        %1268 = vmatprep.subr.mxu0 0.0
        %1269 = vmatpush1.msra.mxu0 %v939
        %1270 = vmatprep.subr.mxu0 0.0
        %1271 = vmatpush1.msra.mxu0 0.0
        %1272 = vmatprep.subr.mxu0 0.0
        %1273 = vmatpush1.msra.mxu0 0.0
        %1274 = vmatprep.subr.mxu0 0.0
        %1275 = vmatpush1.msra.mxu0 0.0
        %1276 = vmatprep.subr.mxu0 0.0
        %1277 = vmatpush1.msra.mxu0 0.0
        %1278 = vmatprep.subr.mxu0 0.0
        %1279 = vmatpush1.msra.mxu0 0.0
        %1280 = vmatprep.subr.mxu0 0.0
        %1281 = vmatpush1.msra.mxu0 0.0
        %1282 = vmatprep.subr.mxu0 0.0
        %1283 = vmatpush1.msra.mxu0 0.0
        %1284 = vmatprep.subr.mxu0 0.0
        %1285 = vmatpush1.msra.mxu0 0.0
        %1286 = vmatprep.subr.mxu0 0.0
        %1287 = vmatpush1.msra.mxu0 0.0
        %1288 = vmatprep.subr.mxu0 0.0
        %1289 = vmatpush1.msra.mxu0 0.0
        %1290 = vmatprep.subr.mxu0 0.0
        %1291 = vmatpush1.msra.mxu0 0.0
        %1292 = vmatprep.subr.mxu0 0.0
        %1293 = vmatpush1.msra.mxu0 0.0
        %1294 = vmatprep.subr.mxu0 0.0
        %1295 = vmatpush1.msra.mxu0 0.0
        %1296 = vmatprep.subr.mxu0 0.0
        %1297 = vmatpush1.msra.mxu0 0.0
        %1298 = vmatprep.subr.mxu0 0.0
        %1299 = vmatpush1.msra.mxu0 0.0
        %1300 = vmatprep.subr.mxu0 0.0
        %1301 = vmatpush1.msra.mxu0 0.0
        %1302 = vmatprep.subr.mxu0 0.0
        %1303 = vmatpush1.msra.mxu0 0.0
        %1304 = vmatprep.subr.mxu0 0.0
        %1305 = vmatpush1.msra.mxu0 0.0
        %1306 = vmatprep.subr.mxu0 0.0
        %1307 = vmatpush1.msra.mxu0 0.0
        %1308 = vmatprep.subr.mxu0 0.0
        %1309 = vmatpush1.msra.mxu0 0.0
        %1310 = vmatprep.subr.mxu0 0.0
        %1311 = vmatpush1.msra.mxu0 0.0
        %1312 = vmatprep.subr.mxu0 0.0
        %1313 = vmatpush1.msra.mxu0 0.0
        %1314 = vmatprep.subr.mxu0 0.0
        %1315 = vmatpush1.msra.mxu0 0.0
        %1316 = vmatprep.subr.mxu0 0.0
        %1317 = vmatpush1.msra.mxu0 0.0
        %1318 = vmatprep.subr.mxu0 0.0
        %1319 = vmatpush1.msra.mxu0 0.0
        %1320 = vmatprep.subr.mxu0 0.0
        %1321 = vmatpush1.msra.mxu0 0.0
        %1322 = vmatprep.subr.mxu0 0.0
        %1323 = vmatpush1.msra.mxu0 0.0
        %1324 = vmatprep.subr.mxu0 0.0
        %1325 = vmatpush1.msra.mxu0 0.0
        %1326 = vmatprep.subr.mxu0 0.0
        %1327 = vmatpush1.msra.mxu0 0.0
        %1328 = vmatprep.subr.mxu0 0.0
        %1329 = vmatpush1.msra.mxu0 0.0
        %1330 = vmatprep.subr.mxu0 0.0
        %1331 = vmatpush1.msra.mxu0 0.0
        %1332 = vmatprep.mubr.f32.mxu0 0.0
        %1333 = vmatmul.mubr.f32.gmra.mrb[0].mxu0 %v1263
        %v1334 = vpop.f32.mrb[0].mxu0
        %v1335 = vadd.f32 0.0, %v1334
        %v1336 = vpop.f32.mrb[0].mxu0
        %1337 = vmatprep.mubr.f32.mxu0 0.0
        %1338 = vmatmul.mubr.f32.gmra.mrb[0].mxu0 %v1266
        %v1339 = vpop.f32.mrb[0].mxu0
        %v1340 = vadd.f32 0.0, %v1339
        %v1341 = vpop.f32.mrb[0].mxu0
        %1342 = vdwg.mxu0
        %v1343 = vadd.f32 %v1254, %v1335
        %v1344 = vadd.f32 %v1259, %v1340
        %v1346 = vlaneseq
        %v1347 = vshrl.u32 %v1346, 7
        %v1348 = vsub.s32 0, %v1347
        %v1349 = vrot.slane %v940, %v1348
        %v1351 = vadd.f32 %v1343, %v1349
        %v1352 = vadd.f32 %v1344, %v1349
        %v1353 = vmax.f32 %v1351, 0.0
        %v1354 = vmax.f32 %v1352, 0.0
        %v1355 = vld [vmem:[%s13] sm:$0xff]
        %v1356 = vld [vmem:[%s13 + $0x8] sm:$0xff]
        %v1357 = vld [vmem:[%s13 + $0x10] sm:$0xff]
        %v1358 = vld [vmem:[%s13 + $0x18] sm:$0xff]
        %v1359 = vld [vmem:[%s13 + $0x20] sm:$0xff]
        %v1360 = vld [vmem:[%s13 + $0x28] sm:$0xff]
        %v1361 = vld [vmem:[%s14] sm:$0x1]
        %1362 = vmatprep.subr.mxu0 0.0
        %1363 = vmatpush1.msra.mxu0 %v1353
        %1364 = vmatprep.subr.mxu0 0.0
        %1365 = vmatpush1.msra.mxu0 %v1354
        %1366 = vmatprep.subr.mxu0 0.0
        %1367 = vmatpush1.msra.mxu0 0.0
        %1368 = vmatprep.subr.mxu0 0.0
        %1369 = vmatpush1.msra.mxu0 0.0
        %1370 = vmatprep.subr.mxu0 0.0
        %1371 = vmatpush1.msra.mxu0 0.0
        %1372 = vmatprep.subr.mxu0 0.0
        %1373 = vmatpush1.msra.mxu0 0.0
        %1374 = vmatprep.subr.mxu0 0.0
        %1375 = vmatpush1.msra.mxu0 0.0
        %1376 = vmatprep.subr.mxu0 0.0
        %1377 = vmatpush1.msra.mxu0 0.0
        %1378 = vmatprep.subr.mxu0 0.0
        %1379 = vmatpush1.msra.mxu0 0.0
        %1380 = vmatprep.subr.mxu0 0.0
        %1381 = vmatpush1.msra.mxu0 0.0
        %1382 = vmatprep.subr.mxu0 0.0
        %1383 = vmatpush1.msra.mxu0 0.0
        %1384 = vmatprep.subr.mxu0 0.0
        %1385 = vmatpush1.msra.mxu0 0.0
        %1386 = vmatprep.subr.mxu0 0.0
        %1387 = vmatpush1.msra.mxu0 0.0
        %1388 = vmatprep.subr.mxu0 0.0
        %1389 = vmatpush1.msra.mxu0 0.0
        %1390 = vmatprep.subr.mxu0 0.0
        %1391 = vmatpush1.msra.mxu0 0.0
        %1392 = vmatprep.subr.mxu0 0.0
        %1393 = vmatpush1.msra.mxu0 0.0
        %1394 = vmatprep.subr.mxu0 0.0
        %1395 = vmatpush1.msra.mxu0 0.0
        %1396 = vmatprep.subr.mxu0 0.0
        %1397 = vmatpush1.msra.mxu0 0.0
        %1398 = vmatprep.subr.mxu0 0.0
        %1399 = vmatpush1.msra.mxu0 0.0
        %1400 = vmatprep.subr.mxu0 0.0
        %1401 = vmatpush1.msra.mxu0 0.0
        %1402 = vmatprep.subr.mxu0 0.0
        %1403 = vmatpush1.msra.mxu0 0.0
        %1404 = vmatprep.subr.mxu0 0.0
        %1405 = vmatpush1.msra.mxu0 0.0
        %1406 = vmatprep.subr.mxu0 0.0
        %1407 = vmatpush1.msra.mxu0 0.0
        %1408 = vmatprep.subr.mxu0 0.0
        %1409 = vmatpush1.msra.mxu0 0.0
        %1410 = vmatprep.subr.mxu0 0.0
        %1411 = vmatpush1.msra.mxu0 0.0
        %1412 = vmatprep.subr.mxu0 0.0
        %1413 = vmatpush1.msra.mxu0 0.0
        %1414 = vmatprep.subr.mxu0 0.0
        %1415 = vmatpush1.msra.mxu0 0.0
        %1416 = vmatprep.subr.mxu0 0.0
        %1417 = vmatpush1.msra.mxu0 0.0
        %1418 = vmatprep.subr.mxu0 0.0
        %1419 = vmatpush1.msra.mxu0 0.0
        %1420 = vmatprep.subr.mxu0 0.0
        %1421 = vmatpush1.msra.mxu0 0.0
        %1422 = vmatprep.subr.mxu0 0.0
        %1423 = vmatpush1.msra.mxu0 0.0
        %1424 = vmatprep.subr.mxu0 0.0
        %1425 = vmatpush1.msra.mxu0 0.0
        %1426 = vmatprep.mubr.f32.mxu0 0.0
        %1427 = vmatmul.mubr.f32.gmra.mrb[0].mxu0 %v943
        %v1428 = vpop.f32.mrb[0].mxu0
        %v1429 = vadd.f32 0.0, %v1428
        %v1430 = vpop.f32.mrb[0].mxu0
        %1431 = vmatprep.mubr.f32.mxu0 0.0
        %1432 = vmatmul.mubr.f32.gmra.mrb[0].mxu0 %v946
        %v1433 = vpop.f32.mrb[0].mxu0
        %v1434 = vadd.f32 0.0, %v1433
        %v1435 = vpop.f32.mrb[0].mxu0
        %1436 = vdwg.mxu0
        %1437 = vmatprep.subr.mxu0 0.0
        %1438 = vmatpush1.msra.mxu0 %v1353
        %1439 = vmatprep.subr.mxu0 0.0
        %1440 = vmatpush1.msra.mxu0 %v1354
        %1441 = vmatprep.subr.mxu0 0.0
        %1442 = vmatpush1.msra.mxu0 0.0
        %1443 = vmatprep.subr.mxu0 0.0
        %1444 = vmatpush1.msra.mxu0 0.0
        %1445 = vmatprep.subr.mxu0 0.0
        %1446 = vmatpush1.msra.mxu0 0.0
        %1447 = vmatprep.subr.mxu0 0.0
        %1448 = vmatpush1.msra.mxu0 0.0
        %1449 = vmatprep.subr.mxu0 0.0
        %1450 = vmatpush1.msra.mxu0 0.0
        %1451 = vmatprep.subr.mxu0 0.0
        %1452 = vmatpush1.msra.mxu0 0.0
        %1453 = vmatprep.subr.mxu0 0.0
        %1454 = vmatpush1.msra.mxu0 0.0
        %1455 = vmatprep.subr.mxu0 0.0
        %1456 = vmatpush1.msra.mxu0 0.0
        %1457 = vmatprep.subr.mxu0 0.0
        %1458 = vmatpush1.msra.mxu0 0.0
        %1459 = vmatprep.subr.mxu0 0.0
        %1460 = vmatpush1.msra.mxu0 0.0
        %1461 = vmatprep.subr.mxu0 0.0
        %1462 = vmatpush1.msra.mxu0 0.0
        %1463 = vmatprep.subr.mxu0 0.0
        %1464 = vmatpush1.msra.mxu0 0.0
        %1465 = vmatprep.subr.mxu0 0.0
        %1466 = vmatpush1.msra.mxu0 0.0
        %1467 = vmatprep.subr.mxu0 0.0
        %1468 = vmatpush1.msra.mxu0 0.0
        %1469 = vmatprep.subr.mxu0 0.0
        %1470 = vmatpush1.msra.mxu0 0.0
        %1471 = vmatprep.subr.mxu0 0.0
        %1472 = vmatpush1.msra.mxu0 0.0
        %1473 = vmatprep.subr.mxu0 0.0
        %1474 = vmatpush1.msra.mxu0 0.0
        %1475 = vmatprep.subr.mxu0 0.0
        %1476 = vmatpush1.msra.mxu0 0.0
        %1477 = vmatprep.subr.mxu0 0.0
        %1478 = vmatpush1.msra.mxu0 0.0
        %1479 = vmatprep.subr.mxu0 0.0
        %1480 = vmatpush1.msra.mxu0 0.0
        %1481 = vmatprep.subr.mxu0 0.0
        %1482 = vmatpush1.msra.mxu0 0.0
        %1483 = vmatprep.subr.mxu0 0.0
        %1484 = vmatpush1.msra.mxu0 0.0
        %1485 = vmatprep.subr.mxu0 0.0
        %1486 = vmatpush1.msra.mxu0 0.0
        %1487 = vmatprep.subr.mxu0 0.0
        %1488 = vmatpush1.msra.mxu0 0.0
        %1489 = vmatprep.subr.mxu0 0.0
        %1490 = vmatpush1.msra.mxu0 0.0
        %1491 = vmatprep.subr.mxu0 0.0
        %1492 = vmatpush1.msra.mxu0 0.0
        %1493 = vmatprep.subr.mxu0 0.0
        %1494 = vmatpush1.msra.mxu0 0.0
        %1495 = vmatprep.subr.mxu0 0.0
        %1496 = vmatpush1.msra.mxu0 0.0
        %1497 = vmatprep.subr.mxu0 0.0
        %1498 = vmatpush1.msra.mxu0 0.0
        %1499 = vmatprep.subr.mxu0 0.0
        %1500 = vmatpush1.msra.mxu0 0.0
        %1501 = vmatprep.mubr.f32.mxu0 0.0
        %1502 = vmatmul.mubr.f32.gmra.mrb[0].mxu0 %v1024
        %v1503 = vpop.f32.mrb[0].mxu0
        %v1504 = vadd.f32 0.0, %v1503
        %v1505 = vpop.f32.mrb[0].mxu0
        %1506 = vmatprep.mubr.f32.mxu0 0.0
        %1507 = vmatmul.mubr.f32.gmra.mrb[0].mxu0 %v1027
        %v1508 = vpop.f32.mrb[0].mxu0
        %v1509 = vadd.f32 0.0, %v1508
        %v1510 = vpop.f32.mrb[0].mxu0
        %1511 = vdwg.mxu0
        %v1513 = vsel %vm941, %v1353, 0
        %v1516 = vsel %vm941, %v1354, 0
        %1518 = vmatprep.subr.mxu0 0.0
        %1519 = vmatpush1.msra.mxu0 %v1357
        %1520 = vmatprep.subr.mxu0 0.0
        %1521 = vmatpush1.msra.mxu0 %v1358
        %1522 = vmatprep.subr.mxu0 0.0
        %1523 = vmatpush1.msra.mxu0 0.0
        %1524 = vmatprep.subr.mxu0 0.0
        %1525 = vmatpush1.msra.mxu0 0.0
        %1526 = vmatprep.subr.mxu0 0.0
        %1527 = vmatpush1.msra.mxu0 0.0
        %1528 = vmatprep.subr.mxu0 0.0
        %1529 = vmatpush1.msra.mxu0 0.0
        %1530 = vmatprep.subr.mxu0 0.0
        %1531 = vmatpush1.msra.mxu0 0.0
        %1532 = vmatprep.subr.mxu0 0.0
        %1533 = vmatpush1.msra.mxu0 0.0
        %1534 = vmatprep.subr.mxu0 0.0
        %1535 = vmatpush1.msra.mxu0 0.0
        %1536 = vmatprep.subr.mxu0 0.0
        %1537 = vmatpush1.msra.mxu0 0.0
        %1538 = vmatprep.subr.mxu0 0.0
        %1539 = vmatpush1.msra.mxu0 0.0
        %1540 = vmatprep.subr.mxu0 0.0
        %1541 = vmatpush1.msra.mxu0 0.0
        %1542 = vmatprep.subr.mxu0 0.0
        %1543 = vmatpush1.msra.mxu0 0.0
        %1544 = vmatprep.subr.mxu0 0.0
        %1545 = vmatpush1.msra.mxu0 0.0
        %1546 = vmatprep.subr.mxu0 0.0
        %1547 = vmatpush1.msra.mxu0 0.0
        %1548 = vmatprep.subr.mxu0 0.0
        %1549 = vmatpush1.msra.mxu0 0.0
        %1550 = vmatprep.subr.mxu0 0.0
        %1551 = vmatpush1.msra.mxu0 0.0
        %1552 = vmatprep.subr.mxu0 0.0
        %1553 = vmatpush1.msra.mxu0 0.0
        %1554 = vmatprep.subr.mxu0 0.0
        %1555 = vmatpush1.msra.mxu0 0.0
        %1556 = vmatprep.subr.mxu0 0.0
        %1557 = vmatpush1.msra.mxu0 0.0
        %1558 = vmatprep.subr.mxu0 0.0
        %1559 = vmatpush1.msra.mxu0 0.0
        %1560 = vmatprep.subr.mxu0 0.0
        %1561 = vmatpush1.msra.mxu0 0.0
        %1562 = vmatprep.subr.mxu0 0.0
        %1563 = vmatpush1.msra.mxu0 0.0
        %1564 = vmatprep.subr.mxu0 0.0
        %1565 = vmatpush1.msra.mxu0 0.0
        %1566 = vmatprep.subr.mxu0 0.0
        %1567 = vmatpush1.msra.mxu0 0.0
        %1568 = vmatprep.subr.mxu0 0.0
        %1569 = vmatpush1.msra.mxu0 0.0
        %1570 = vmatprep.subr.mxu0 0.0
        %1571 = vmatpush1.msra.mxu0 0.0
        %1572 = vmatprep.subr.mxu0 0.0
        %1573 = vmatpush1.msra.mxu0 0.0
        %1574 = vmatprep.subr.mxu0 0.0
        %1575 = vmatpush1.msra.mxu0 0.0
        %1576 = vmatprep.subr.mxu0 0.0
        %1577 = vmatpush1.msra.mxu0 0.0
        %1578 = vmatprep.subr.mxu0 0.0
        %1579 = vmatpush1.msra.mxu0 0.0
        %1580 = vmatprep.subr.mxu0 0.0
        %1581 = vmatpush1.msra.mxu0 0.0
        %1582 = vmatprep.mubr.f32.mxu0 0.0
        %1583 = vmatmul.mubr.f32.gmra.mrb[0].mxu0 %v1513
        %v1584 = vpop.f32.mrb[0].mxu0
        %v1585 = vadd.f32 0.0, %v1584
        %v1586 = vpop.f32.mrb[0].mxu0
        %1587 = vmatprep.mubr.f32.mxu0 0.0
        %1588 = vmatmul.mubr.f32.gmra.mrb[0].mxu0 %v1516
        %v1589 = vpop.f32.mrb[0].mxu0
        %v1590 = vadd.f32 0.0, %v1589
        %v1591 = vpop.f32.mrb[0].mxu0
        %1592 = vdwg.mxu0
        %v1594 = vsel %vm941, %v1429, 0
        %v1597 = vsel %vm941, %v1434, 0
        %1599 = vmatprep.subr.mxu0 0.0
        %1600 = vmatpush1.msra.mxu0 %v1355
        %1601 = vmatprep.subr.mxu0 0.0
        %1602 = vmatpush1.msra.mxu0 %v1356
        %1603 = vmatprep.subr.mxu0 0.0
        %1604 = vmatpush1.msra.mxu0 0.0
        %1605 = vmatprep.subr.mxu0 0.0
        %1606 = vmatpush1.msra.mxu0 0.0
        %1607 = vmatprep.subr.mxu0 0.0
        %1608 = vmatpush1.msra.mxu0 0.0
        %1609 = vmatprep.subr.mxu0 0.0
        %1610 = vmatpush1.msra.mxu0 0.0
        %1611 = vmatprep.subr.mxu0 0.0
        %1612 = vmatpush1.msra.mxu0 0.0
        %1613 = vmatprep.subr.mxu0 0.0
        %1614 = vmatpush1.msra.mxu0 0.0
        %1615 = vmatprep.subr.mxu0 0.0
        %1616 = vmatpush1.msra.mxu0 0.0
        %1617 = vmatprep.subr.mxu0 0.0
        %1618 = vmatpush1.msra.mxu0 0.0
        %1619 = vmatprep.subr.mxu0 0.0
        %1620 = vmatpush1.msra.mxu0 0.0
        %1621 = vmatprep.subr.mxu0 0.0
        %1622 = vmatpush1.msra.mxu0 0.0
        %1623 = vmatprep.subr.mxu0 0.0
        %1624 = vmatpush1.msra.mxu0 0.0
        %1625 = vmatprep.subr.mxu0 0.0
        %1626 = vmatpush1.msra.mxu0 0.0
        %1627 = vmatprep.subr.mxu0 0.0
        %1628 = vmatpush1.msra.mxu0 0.0
        %1629 = vmatprep.subr.mxu0 0.0
        %1630 = vmatpush1.msra.mxu0 0.0
        %1631 = vmatprep.subr.mxu0 0.0
        %1632 = vmatpush1.msra.mxu0 0.0
        %1633 = vmatprep.subr.mxu0 0.0
        %1634 = vmatpush1.msra.mxu0 0.0
        %1635 = vmatprep.subr.mxu0 0.0
        %1636 = vmatpush1.msra.mxu0 0.0
        %1637 = vmatprep.subr.mxu0 0.0
        %1638 = vmatpush1.msra.mxu0 0.0
        %1639 = vmatprep.subr.mxu0 0.0
        %1640 = vmatpush1.msra.mxu0 0.0
        %1641 = vmatprep.subr.mxu0 0.0
        %1642 = vmatpush1.msra.mxu0 0.0
        %1643 = vmatprep.subr.mxu0 0.0
        %1644 = vmatpush1.msra.mxu0 0.0
        %1645 = vmatprep.subr.mxu0 0.0
        %1646 = vmatpush1.msra.mxu0 0.0
        %1647 = vmatprep.subr.mxu0 0.0
        %1648 = vmatpush1.msra.mxu0 0.0
        %1649 = vmatprep.subr.mxu0 0.0
        %1650 = vmatpush1.msra.mxu0 0.0
        %1651 = vmatprep.subr.mxu0 0.0
        %1652 = vmatpush1.msra.mxu0 0.0
        %1653 = vmatprep.subr.mxu0 0.0
        %1654 = vmatpush1.msra.mxu0 0.0
        %1655 = vmatprep.subr.mxu0 0.0
        %1656 = vmatpush1.msra.mxu0 0.0
        %1657 = vmatprep.subr.mxu0 0.0
        %1658 = vmatpush1.msra.mxu0 0.0
        %1659 = vmatprep.subr.mxu0 0.0
        %1660 = vmatpush1.msra.mxu0 0.0
        %1661 = vmatprep.subr.mxu0 0.0
        %1662 = vmatpush1.msra.mxu0 0.0
        %1663 = vmatprep.mubr.f32.mxu0 0.0
        %1664 = vmatmul.mubr.f32.gmra.mrb[0].mxu0 %v1594
        %v1665 = vpop.f32.mrb[0].mxu0
        %v1666 = vadd.f32 %v1585, %v1665
        %v1667 = vpop.f32.mrb[0].mxu0
        %1668 = vmatprep.mubr.f32.mxu0 0.0
        %1669 = vmatmul.mubr.f32.gmra.mrb[0].mxu0 %v1597
        %v1670 = vpop.f32.mrb[0].mxu0
        %v1671 = vadd.f32 %v1590, %v1670
        %v1672 = vpop.f32.mrb[0].mxu0
        %1673 = vdwg.mxu0
        %v1675 = vsel %vm941, %v1504, 0
        %v1678 = vsel %vm941, %v1509, 0
        %1680 = vmatprep.subr.mxu0 0.0
        %1681 = vmatpush1.msra.mxu0 %v1359
        %1682 = vmatprep.subr.mxu0 0.0
        %1683 = vmatpush1.msra.mxu0 %v1360
        %1684 = vmatprep.subr.mxu0 0.0
        %1685 = vmatpush1.msra.mxu0 0.0
        %1686 = vmatprep.subr.mxu0 0.0
        %1687 = vmatpush1.msra.mxu0 0.0
        %1688 = vmatprep.subr.mxu0 0.0
        %1689 = vmatpush1.msra.mxu0 0.0
        %1690 = vmatprep.subr.mxu0 0.0
        %1691 = vmatpush1.msra.mxu0 0.0
        %1692 = vmatprep.subr.mxu0 0.0
        %1693 = vmatpush1.msra.mxu0 0.0
        %1694 = vmatprep.subr.mxu0 0.0
        %1695 = vmatpush1.msra.mxu0 0.0
        %1696 = vmatprep.subr.mxu0 0.0
        %1697 = vmatpush1.msra.mxu0 0.0
        %1698 = vmatprep.subr.mxu0 0.0
        %1699 = vmatpush1.msra.mxu0 0.0
        %1700 = vmatprep.subr.mxu0 0.0
        %1701 = vmatpush1.msra.mxu0 0.0
        %1702 = vmatprep.subr.mxu0 0.0
        %1703 = vmatpush1.msra.mxu0 0.0
        %1704 = vmatprep.subr.mxu0 0.0
        %1705 = vmatpush1.msra.mxu0 0.0
        %1706 = vmatprep.subr.mxu0 0.0
        %1707 = vmatpush1.msra.mxu0 0.0
        %1708 = vmatprep.subr.mxu0 0.0
        %1709 = vmatpush1.msra.mxu0 0.0
        %1710 = vmatprep.subr.mxu0 0.0
        %1711 = vmatpush1.msra.mxu0 0.0
        %1712 = vmatprep.subr.mxu0 0.0
        %1713 = vmatpush1.msra.mxu0 0.0
        %1714 = vmatprep.subr.mxu0 0.0
        %1715 = vmatpush1.msra.mxu0 0.0
        %1716 = vmatprep.subr.mxu0 0.0
        %1717 = vmatpush1.msra.mxu0 0.0
        %1718 = vmatprep.subr.mxu0 0.0
        %1719 = vmatpush1.msra.mxu0 0.0
        %1720 = vmatprep.subr.mxu0 0.0
        %1721 = vmatpush1.msra.mxu0 0.0
        %1722 = vmatprep.subr.mxu0 0.0
        %1723 = vmatpush1.msra.mxu0 0.0
        %1724 = vmatprep.subr.mxu0 0.0
        %1725 = vmatpush1.msra.mxu0 0.0
        %1726 = vmatprep.subr.mxu0 0.0
        %1727 = vmatpush1.msra.mxu0 0.0
        %1728 = vmatprep.subr.mxu0 0.0
        %1729 = vmatpush1.msra.mxu0 0.0
        %1730 = vmatprep.subr.mxu0 0.0
        %1731 = vmatpush1.msra.mxu0 0.0
        %1732 = vmatprep.subr.mxu0 0.0
        %1733 = vmatpush1.msra.mxu0 0.0
        %1734 = vmatprep.subr.mxu0 0.0
        %1735 = vmatpush1.msra.mxu0 0.0
        %1736 = vmatprep.subr.mxu0 0.0
        %1737 = vmatpush1.msra.mxu0 0.0
        %1738 = vmatprep.subr.mxu0 0.0
        %1739 = vmatpush1.msra.mxu0 0.0
        %1740 = vmatprep.subr.mxu0 0.0
        %1741 = vmatpush1.msra.mxu0 0.0
        %1742 = vmatprep.subr.mxu0 0.0
        %1743 = vmatpush1.msra.mxu0 0.0
        %1744 = vmatprep.mubr.f32.mxu0 0.0
        %1745 = vmatmul.mubr.f32.gmra.mrb[0].mxu0 %v1675
        %v1746 = vpop.f32.mrb[0].mxu0
        %v1747 = vadd.f32 0.0, %v1746
        %v1748 = vpop.f32.mrb[0].mxu0
        %1749 = vmatprep.mubr.f32.mxu0 0.0
        %1750 = vmatmul.mubr.f32.gmra.mrb[0].mxu0 %v1678
        %v1751 = vpop.f32.mrb[0].mxu0
        %v1752 = vadd.f32 0.0, %v1751
        %v1753 = vpop.f32.mrb[0].mxu0
        %1754 = vdwg.mxu0
        %v1755 = vadd.f32 %v1666, %v1747
        %v1756 = vadd.f32 %v1671, %v1752
        %v1758 = vlaneseq
        %v1759 = vshrl.u32 %v1758, 7
        %v1760 = vsub.s32 0, %v1759
        %v1761 = vrot.slane %v1361, %v1760
        %v1763 = vadd.f32 %v1755, %v1761
        %v1764 = vadd.f32 %v1756, %v1761
        %v1765 = vmax.f32 %v1763, 0.0
        %v1766 = vmax.f32 %v1764, 0.0
        %v1767 = vld [vmem:[%s15] sm:$0xff]
        %v1768 = vld [vmem:[%s15 + $0x8] sm:$0xff]
        %v1769 = vld [vmem:[%s15 + $0x10] sm:$0xff]
        %v1770 = vld [vmem:[%s15 + $0x18] sm:$0xff]
        %v1771 = vld [vmem:[%s15 + $0x20] sm:$0xff]
        %v1772 = vld [vmem:[%s15 + $0x28] sm:$0xff]
        %v1773 = vld [vmem:[%s15 + $0x30] sm:$0xff]
        %v1774 = vld [vmem:[%s15 + $0x38] sm:$0xff]
        %v1775 = vld [vmem:[%s15 + $0x40] sm:$0xff]
        %v1776 = vld [vmem:[%s15 + $0x48] sm:$0xff]
        %v1777 = vld [vmem:[%s15 + $0x50] sm:$0xff]
        %v1778 = vld [vmem:[%s15 + $0x58] sm:$0xff]
        %v1779 = vld [vmem:[%s16] sm:$0x1]
        %1780 = vmatprep.subr.mxu0 0.0
        %1781 = vmatpush1.msra.mxu0 %v1765
        %1782 = vmatprep.subr.mxu0 0.0
        %1783 = vmatpush1.msra.mxu0 %v1766
        %1784 = vmatprep.subr.mxu0 0.0
        %1785 = vmatpush1.msra.mxu0 0.0
        %1786 = vmatprep.subr.mxu0 0.0
        %1787 = vmatpush1.msra.mxu0 0.0
        %1788 = vmatprep.subr.mxu0 0.0
        %1789 = vmatpush1.msra.mxu0 0.0
        %1790 = vmatprep.subr.mxu0 0.0
        %1791 = vmatpush1.msra.mxu0 0.0
        %1792 = vmatprep.subr.mxu0 0.0
        %1793 = vmatpush1.msra.mxu0 0.0
        %1794 = vmatprep.subr.mxu0 0.0
        %1795 = vmatpush1.msra.mxu0 0.0
        %1796 = vmatprep.subr.mxu0 0.0
        %1797 = vmatpush1.msra.mxu0 0.0
        %1798 = vmatprep.subr.mxu0 0.0
        %1799 = vmatpush1.msra.mxu0 0.0
        %1800 = vmatprep.subr.mxu0 0.0
        %1801 = vmatpush1.msra.mxu0 0.0
        %1802 = vmatprep.subr.mxu0 0.0
        %1803 = vmatpush1.msra.mxu0 0.0
        %1804 = vmatprep.subr.mxu0 0.0
        %1805 = vmatpush1.msra.mxu0 0.0
        %1806 = vmatprep.subr.mxu0 0.0
        %1807 = vmatpush1.msra.mxu0 0.0
        %1808 = vmatprep.subr.mxu0 0.0
        %1809 = vmatpush1.msra.mxu0 0.0
        %1810 = vmatprep.subr.mxu0 0.0
        %1811 = vmatpush1.msra.mxu0 0.0
        %1812 = vmatprep.subr.mxu0 0.0
        %1813 = vmatpush1.msra.mxu0 0.0
        %1814 = vmatprep.subr.mxu0 0.0
        %1815 = vmatpush1.msra.mxu0 0.0
        %1816 = vmatprep.subr.mxu0 0.0
        %1817 = vmatpush1.msra.mxu0 0.0
        %1818 = vmatprep.subr.mxu0 0.0
        %1819 = vmatpush1.msra.mxu0 0.0
        %1820 = vmatprep.subr.mxu0 0.0
        %1821 = vmatpush1.msra.mxu0 0.0
        %1822 = vmatprep.subr.mxu0 0.0
        %1823 = vmatpush1.msra.mxu0 0.0
        %1824 = vmatprep.subr.mxu0 0.0
        %1825 = vmatpush1.msra.mxu0 0.0
        %1826 = vmatprep.subr.mxu0 0.0
        %1827 = vmatpush1.msra.mxu0 0.0
        %1828 = vmatprep.subr.mxu0 0.0
        %1829 = vmatpush1.msra.mxu0 0.0
        %1830 = vmatprep.subr.mxu0 0.0
        %1831 = vmatpush1.msra.mxu0 0.0
        %1832 = vmatprep.subr.mxu0 0.0
        %1833 = vmatpush1.msra.mxu0 0.0
        %1834 = vmatprep.subr.mxu0 0.0
        %1835 = vmatpush1.msra.mxu0 0.0
        %1836 = vmatprep.subr.mxu0 0.0
        %1837 = vmatpush1.msra.mxu0 0.0
        %1838 = vmatprep.subr.mxu0 0.0
        %1839 = vmatpush1.msra.mxu0 0.0
        %1840 = vmatprep.subr.mxu0 0.0
        %1841 = vmatpush1.msra.mxu0 0.0
        %1842 = vmatprep.subr.mxu0 0.0
        %1843 = vmatpush1.msra.mxu0 0.0
        %1844 = vmatprep.mubr.f32.mxu0 0.0
        %1845 = vmatmul.mubr.f32.gmra.mrb[0].mxu0 %v943
        %v1846 = vpop.f32.mrb[0].mxu0
        %v1847 = vadd.f32 0.0, %v1846
        %v1848 = vpop.f32.mrb[0].mxu0
        %1849 = vmatprep.mubr.f32.mxu0 0.0
        %1850 = vmatmul.mubr.f32.gmra.mrb[0].mxu0 %v946
        %v1851 = vpop.f32.mrb[0].mxu0
        %v1852 = vadd.f32 0.0, %v1851
        %v1853 = vpop.f32.mrb[0].mxu0
        %1854 = vdwg.mxu0
        %1855 = vmatprep.subr.mxu0 0.0
        %1856 = vmatpush1.msra.mxu0 %v1765
        %1857 = vmatprep.subr.mxu0 0.0
        %1858 = vmatpush1.msra.mxu0 %v1766
        %1859 = vmatprep.subr.mxu0 0.0
        %1860 = vmatpush1.msra.mxu0 0.0
        %1861 = vmatprep.subr.mxu0 0.0
        %1862 = vmatpush1.msra.mxu0 0.0
        %1863 = vmatprep.subr.mxu0 0.0
        %1864 = vmatpush1.msra.mxu0 0.0
        %1865 = vmatprep.subr.mxu0 0.0
        %1866 = vmatpush1.msra.mxu0 0.0
        %1867 = vmatprep.subr.mxu0 0.0
        %1868 = vmatpush1.msra.mxu0 0.0
        %1869 = vmatprep.subr.mxu0 0.0
        %1870 = vmatpush1.msra.mxu0 0.0
        %1871 = vmatprep.subr.mxu0 0.0
        %1872 = vmatpush1.msra.mxu0 0.0
        %1873 = vmatprep.subr.mxu0 0.0
        %1874 = vmatpush1.msra.mxu0 0.0
        %1875 = vmatprep.subr.mxu0 0.0
        %1876 = vmatpush1.msra.mxu0 0.0
        %1877 = vmatprep.subr.mxu0 0.0
        %1878 = vmatpush1.msra.mxu0 0.0
        %1879 = vmatprep.subr.mxu0 0.0
        %1880 = vmatpush1.msra.mxu0 0.0
        %1881 = vmatprep.subr.mxu0 0.0
        %1882 = vmatpush1.msra.mxu0 0.0
        %1883 = vmatprep.subr.mxu0 0.0
        %1884 = vmatpush1.msra.mxu0 0.0
        %1885 = vmatprep.subr.mxu0 0.0
        %1886 = vmatpush1.msra.mxu0 0.0
        %1887 = vmatprep.subr.mxu0 0.0
        %1888 = vmatpush1.msra.mxu0 0.0
        %1889 = vmatprep.subr.mxu0 0.0
        %1890 = vmatpush1.msra.mxu0 0.0
        %1891 = vmatprep.subr.mxu0 0.0
        %1892 = vmatpush1.msra.mxu0 0.0
        %1893 = vmatprep.subr.mxu0 0.0
        %1894 = vmatpush1.msra.mxu0 0.0
        %1895 = vmatprep.subr.mxu0 0.0
        %1896 = vmatpush1.msra.mxu0 0.0
        %1897 = vmatprep.subr.mxu0 0.0
        %1898 = vmatpush1.msra.mxu0 0.0
        %1899 = vmatprep.subr.mxu0 0.0
        %1900 = vmatpush1.msra.mxu0 0.0
        %1901 = vmatprep.subr.mxu0 0.0
        %1902 = vmatpush1.msra.mxu0 0.0
        %1903 = vmatprep.subr.mxu0 0.0
        %1904 = vmatpush1.msra.mxu0 0.0
        %1905 = vmatprep.subr.mxu0 0.0
        %1906 = vmatpush1.msra.mxu0 0.0
        %1907 = vmatprep.subr.mxu0 0.0
        %1908 = vmatpush1.msra.mxu0 0.0
        %1909 = vmatprep.subr.mxu0 0.0
        %1910 = vmatpush1.msra.mxu0 0.0
        %1911 = vmatprep.subr.mxu0 0.0
        %1912 = vmatpush1.msra.mxu0 0.0
        %1913 = vmatprep.subr.mxu0 0.0
        %1914 = vmatpush1.msra.mxu0 0.0
        %1915 = vmatprep.subr.mxu0 0.0
        %1916 = vmatpush1.msra.mxu0 0.0
        %1917 = vmatprep.subr.mxu0 0.0
        %1918 = vmatpush1.msra.mxu0 0.0
        %1919 = vmatprep.mubr.f32.mxu0 0.0
        %1920 = vmatmul.mubr.f32.gmra.mrb[0].mxu0 %v1024
        %v1921 = vpop.f32.mrb[0].mxu0
        %v1922 = vadd.f32 0.0, %v1921
        %v1923 = vpop.f32.mrb[0].mxu0
        %1924 = vmatprep.mubr.f32.mxu0 0.0
        %1925 = vmatmul.mubr.f32.gmra.mrb[0].mxu0 %v1027
        %v1926 = vpop.f32.mrb[0].mxu0
        %v1927 = vadd.f32 0.0, %v1926
        %v1928 = vpop.f32.mrb[0].mxu0
        %1929 = vdwg.mxu0
        %vm1930 = vcmask 261120
        %v1932 = vsel %vm1930, %v1765, 0
        %v1935 = vsel %vm1930, %v1766, 0
        %1937 = vmatprep.subr.mxu0 0.0
        %1938 = vmatpush1.msra.mxu0 %v1771
        %1939 = vmatprep.subr.mxu0 0.0
        %1940 = vmatpush1.msra.mxu0 %v1772
        %1941 = vmatprep.subr.mxu0 0.0
        %1942 = vmatpush1.msra.mxu0 %v1773
        %1943 = vmatprep.subr.mxu0 0.0
        %1944 = vmatpush1.msra.mxu0 %v1774
        %1945 = vmatprep.subr.mxu0 0.0
        %1946 = vmatpush1.msra.mxu0 0.0
        %1947 = vmatprep.subr.mxu0 0.0
        %1948 = vmatpush1.msra.mxu0 0.0
        %1949 = vmatprep.subr.mxu0 0.0
        %1950 = vmatpush1.msra.mxu0 0.0
        %1951 = vmatprep.subr.mxu0 0.0
        %1952 = vmatpush1.msra.mxu0 0.0
        %1953 = vmatprep.subr.mxu0 0.0
        %1954 = vmatpush1.msra.mxu0 0.0
        %1955 = vmatprep.subr.mxu0 0.0
        %1956 = vmatpush1.msra.mxu0 0.0
        %1957 = vmatprep.subr.mxu0 0.0
        %1958 = vmatpush1.msra.mxu0 0.0
        %1959 = vmatprep.subr.mxu0 0.0
        %1960 = vmatpush1.msra.mxu0 0.0
        %1961 = vmatprep.subr.mxu0 0.0
        %1962 = vmatpush1.msra.mxu0 0.0
        %1963 = vmatprep.subr.mxu0 0.0
        %1964 = vmatpush1.msra.mxu0 0.0
        %1965 = vmatprep.subr.mxu0 0.0
        %1966 = vmatpush1.msra.mxu0 0.0
        %1967 = vmatprep.subr.mxu0 0.0
        %1968 = vmatpush1.msra.mxu0 0.0
        %1969 = vmatprep.subr.mxu0 0.0
        %1970 = vmatpush1.msra.mxu0 0.0
        %1971 = vmatprep.subr.mxu0 0.0
        %1972 = vmatpush1.msra.mxu0 0.0
        %1973 = vmatprep.subr.mxu0 0.0
        %1974 = vmatpush1.msra.mxu0 0.0
        %1975 = vmatprep.subr.mxu0 0.0
        %1976 = vmatpush1.msra.mxu0 0.0
        %1977 = vmatprep.subr.mxu0 0.0
        %1978 = vmatpush1.msra.mxu0 0.0
        %1979 = vmatprep.subr.mxu0 0.0
        %1980 = vmatpush1.msra.mxu0 0.0
        %1981 = vmatprep.subr.mxu0 0.0
        %1982 = vmatpush1.msra.mxu0 0.0
        %1983 = vmatprep.subr.mxu0 0.0
        %1984 = vmatpush1.msra.mxu0 0.0
        %1985 = vmatprep.subr.mxu0 0.0
        %1986 = vmatpush1.msra.mxu0 0.0
        %1987 = vmatprep.subr.mxu0 0.0
        %1988 = vmatpush1.msra.mxu0 0.0
        %1989 = vmatprep.subr.mxu0 0.0
        %1990 = vmatpush1.msra.mxu0 0.0
        %1991 = vmatprep.subr.mxu0 0.0
        %1992 = vmatpush1.msra.mxu0 0.0
        %1993 = vmatprep.subr.mxu0 0.0
        %1994 = vmatpush1.msra.mxu0 0.0
        %1995 = vmatprep.subr.mxu0 0.0
        %1996 = vmatpush1.msra.mxu0 0.0
        %1997 = vmatprep.subr.mxu0 0.0
        %1998 = vmatpush1.msra.mxu0 0.0
        %1999 = vmatprep.subr.mxu0 0.0
        %2000 = vmatpush1.msra.mxu0 0.0
        %2001 = vmatprep.mubr.f32.mxu0 0.0
        %2002 = vmatmul.mubr.f32.gmra.mrb[0].mxu0 %v1932
        %v2003 = vpop.f32.mrb[0].mxu0
        %v2004 = vadd.f32 0.0, %v2003
        %v2005 = vpop.f32.mrb[0].mxu0
        %2006 = vmatprep.mubr.f32.mxu0 0.0
        %2007 = vmatmul.mubr.f32.gmra.mrb[0].mxu0 %v1935
        %v2008 = vpop.f32.mrb[0].mxu0
        %v2009 = vadd.f32 0.0, %v2008
        %v2010 = vpop.f32.mrb[0].mxu0
        %2011 = vdwg.mxu0
        %v2013 = vsel %vm1930, %v1847, 0
        %v2016 = vsel %vm1930, %v1852, 0
        %2018 = vmatprep.subr.mxu0 0.0
        %2019 = vmatpush1.msra.mxu0 %v1767
        %2020 = vmatprep.subr.mxu0 0.0
        %2021 = vmatpush1.msra.mxu0 %v1768
        %2022 = vmatprep.subr.mxu0 0.0
        %2023 = vmatpush1.msra.mxu0 %v1769
        %2024 = vmatprep.subr.mxu0 0.0
        %2025 = vmatpush1.msra.mxu0 %v1770
        %2026 = vmatprep.subr.mxu0 0.0
        %2027 = vmatpush1.msra.mxu0 0.0
        %2028 = vmatprep.subr.mxu0 0.0
        %2029 = vmatpush1.msra.mxu0 0.0
        %2030 = vmatprep.subr.mxu0 0.0
        %2031 = vmatpush1.msra.mxu0 0.0
        %2032 = vmatprep.subr.mxu0 0.0
        %2033 = vmatpush1.msra.mxu0 0.0
        %2034 = vmatprep.subr.mxu0 0.0
        %2035 = vmatpush1.msra.mxu0 0.0
        %2036 = vmatprep.subr.mxu0 0.0
        %2037 = vmatpush1.msra.mxu0 0.0
        %2038 = vmatprep.subr.mxu0 0.0
        %2039 = vmatpush1.msra.mxu0 0.0
        %2040 = vmatprep.subr.mxu0 0.0
        %2041 = vmatpush1.msra.mxu0 0.0
        %2042 = vmatprep.subr.mxu0 0.0
        %2043 = vmatpush1.msra.mxu0 0.0
        %2044 = vmatprep.subr.mxu0 0.0
        %2045 = vmatpush1.msra.mxu0 0.0
        %2046 = vmatprep.subr.mxu0 0.0
        %2047 = vmatpush1.msra.mxu0 0.0
        %2048 = vmatprep.subr.mxu0 0.0
        %2049 = vmatpush1.msra.mxu0 0.0
        %2050 = vmatprep.subr.mxu0 0.0
        %2051 = vmatpush1.msra.mxu0 0.0
        %2052 = vmatprep.subr.mxu0 0.0
        %2053 = vmatpush1.msra.mxu0 0.0
        %2054 = vmatprep.subr.mxu0 0.0
        %2055 = vmatpush1.msra.mxu0 0.0
        %2056 = vmatprep.subr.mxu0 0.0
        %2057 = vmatpush1.msra.mxu0 0.0
        %2058 = vmatprep.subr.mxu0 0.0
        %2059 = vmatpush1.msra.mxu0 0.0
        %2060 = vmatprep.subr.mxu0 0.0
        %2061 = vmatpush1.msra.mxu0 0.0
        %2062 = vmatprep.subr.mxu0 0.0
        %2063 = vmatpush1.msra.mxu0 0.0
        %2064 = vmatprep.subr.mxu0 0.0
        %2065 = vmatpush1.msra.mxu0 0.0
        %2066 = vmatprep.subr.mxu0 0.0
        %2067 = vmatpush1.msra.mxu0 0.0
        %2068 = vmatprep.subr.mxu0 0.0
        %2069 = vmatpush1.msra.mxu0 0.0
        %2070 = vmatprep.subr.mxu0 0.0
        %2071 = vmatpush1.msra.mxu0 0.0
        %2072 = vmatprep.subr.mxu0 0.0
        %2073 = vmatpush1.msra.mxu0 0.0
        %2074 = vmatprep.subr.mxu0 0.0
        %2075 = vmatpush1.msra.mxu0 0.0
        %2076 = vmatprep.subr.mxu0 0.0
        %2077 = vmatpush1.msra.mxu0 0.0
        %2078 = vmatprep.subr.mxu0 0.0
        %2079 = vmatpush1.msra.mxu0 0.0
        %2080 = vmatprep.subr.mxu0 0.0
        %2081 = vmatpush1.msra.mxu0 0.0
        %2082 = vmatprep.mubr.f32.mxu0 0.0
        %2083 = vmatmul.mubr.f32.gmra.mrb[0].mxu0 %v2013
        %v2084 = vpop.f32.mrb[0].mxu0
        %v2085 = vadd.f32 %v2004, %v2084
        %v2086 = vpop.f32.mrb[0].mxu0
        %2087 = vmatprep.mubr.f32.mxu0 0.0
        %2088 = vmatmul.mubr.f32.gmra.mrb[0].mxu0 %v2016
        %v2089 = vpop.f32.mrb[0].mxu0
        %v2090 = vadd.f32 %v2009, %v2089
        %v2091 = vpop.f32.mrb[0].mxu0
        %2092 = vdwg.mxu0
        %v2094 = vsel %vm1930, %v1922, 0
        %v2097 = vsel %vm1930, %v1927, 0
        %2099 = vmatprep.subr.mxu0 0.0
        %2100 = vmatpush1.msra.mxu0 %v1775
        %2101 = vmatprep.subr.mxu0 0.0
        %2102 = vmatpush1.msra.mxu0 %v1776
        %2103 = vmatprep.subr.mxu0 0.0
        %2104 = vmatpush1.msra.mxu0 %v1777
        %2105 = vmatprep.subr.mxu0 0.0
        %2106 = vmatpush1.msra.mxu0 %v1778
        %2107 = vmatprep.subr.mxu0 0.0
        %2108 = vmatpush1.msra.mxu0 0.0
        %2109 = vmatprep.subr.mxu0 0.0
        %2110 = vmatpush1.msra.mxu0 0.0
        %2111 = vmatprep.subr.mxu0 0.0
        %2112 = vmatpush1.msra.mxu0 0.0
        %2113 = vmatprep.subr.mxu0 0.0
        %2114 = vmatpush1.msra.mxu0 0.0
        %2115 = vmatprep.subr.mxu0 0.0
        %2116 = vmatpush1.msra.mxu0 0.0
        %2117 = vmatprep.subr.mxu0 0.0
        %2118 = vmatpush1.msra.mxu0 0.0
        %2119 = vmatprep.subr.mxu0 0.0
        %2120 = vmatpush1.msra.mxu0 0.0
        %2121 = vmatprep.subr.mxu0 0.0
        %2122 = vmatpush1.msra.mxu0 0.0
        %2123 = vmatprep.subr.mxu0 0.0
        %2124 = vmatpush1.msra.mxu0 0.0
        %2125 = vmatprep.subr.mxu0 0.0
        %2126 = vmatpush1.msra.mxu0 0.0
        %2127 = vmatprep.subr.mxu0 0.0
        %2128 = vmatpush1.msra.mxu0 0.0
        %2129 = vmatprep.subr.mxu0 0.0
        %2130 = vmatpush1.msra.mxu0 0.0
        %2131 = vmatprep.subr.mxu0 0.0
        %2132 = vmatpush1.msra.mxu0 0.0
        %2133 = vmatprep.subr.mxu0 0.0
        %2134 = vmatpush1.msra.mxu0 0.0
        %2135 = vmatprep.subr.mxu0 0.0
        %2136 = vmatpush1.msra.mxu0 0.0
        %2137 = vmatprep.subr.mxu0 0.0
        %2138 = vmatpush1.msra.mxu0 0.0
        %2139 = vmatprep.subr.mxu0 0.0
        %2140 = vmatpush1.msra.mxu0 0.0
        %2141 = vmatprep.subr.mxu0 0.0
        %2142 = vmatpush1.msra.mxu0 0.0
        %2143 = vmatprep.subr.mxu0 0.0
        %2144 = vmatpush1.msra.mxu0 0.0
        %2145 = vmatprep.subr.mxu0 0.0
        %2146 = vmatpush1.msra.mxu0 0.0
        %2147 = vmatprep.subr.mxu0 0.0
        %2148 = vmatpush1.msra.mxu0 0.0
        %2149 = vmatprep.subr.mxu0 0.0
        %2150 = vmatpush1.msra.mxu0 0.0
        %2151 = vmatprep.subr.mxu0 0.0
        %2152 = vmatpush1.msra.mxu0 0.0
        %2153 = vmatprep.subr.mxu0 0.0
        %2154 = vmatpush1.msra.mxu0 0.0
        %2155 = vmatprep.subr.mxu0 0.0
        %2156 = vmatpush1.msra.mxu0 0.0
        %2157 = vmatprep.subr.mxu0 0.0
        %2158 = vmatpush1.msra.mxu0 0.0
        %2159 = vmatprep.subr.mxu0 0.0
        %2160 = vmatpush1.msra.mxu0 0.0
        %2161 = vmatprep.subr.mxu0 0.0
        %2162 = vmatpush1.msra.mxu0 0.0
        %2163 = vmatprep.mubr.f32.mxu0 0.0
        %2164 = vmatmul.mubr.f32.gmra.mrb[0].mxu0 %v2094
        %v2165 = vpop.f32.mrb[0].mxu0
        %v2166 = vadd.f32 0.0, %v2165
        %v2167 = vpop.f32.mrb[0].mxu0
        %2168 = vmatprep.mubr.f32.mxu0 0.0
        %2169 = vmatmul.mubr.f32.gmra.mrb[0].mxu0 %v2097
        %v2170 = vpop.f32.mrb[0].mxu0
        %v2171 = vadd.f32 0.0, %v2170
        %v2172 = vpop.f32.mrb[0].mxu0
        %2173 = vdwg.mxu0
        %v2174 = vadd.f32 %v2085, %v2166
        %v2175 = vadd.f32 %v2090, %v2171
        %v2177 = vlaneseq
        %v2178 = vshrl.u32 %v2177, 7
        %v2179 = vsub.s32 0, %v2178
        %v2180 = vrot.slane %v1779, %v2179
        %v2182 = vadd.f32 %v2174, %v2180
        %v2183 = vadd.f32 %v2175, %v2180
        %v2184 = vadd.f32 %v2182, %v829
        %v2185 = vadd.f32 %v2183, %v830
        %v2186 = vadd.f32 %v2184, %v910
        %v2187 = vadd.f32 %v2185, %v911
        %v2188 = vlaneseq
        %v2189 = vshrl.u32 %v2188, 7
        %v2190 = vsub.s32 0, %v2189
        %v2191 = vrot.slane %v712, %v2190
        %v2192 = vadd.f32 %v2186, %v2191
        %v2193 = vadd.f32 %v2187, %v2191
        %2194 = vst.msk [vmem:[%s556] sm:$0xff] %vm637, %v2192
        %2195 = vst.msk [vmem:[%s556 + $0x8] sm:$0xff] %vm637, %v2193
        %p2196 = scmp.lt.s32.totalorder %s29, 1
        %s2197 = scalar_select %p2196, %s29, 1
        %s2198 = smul.addr %s2197, 2
        %s2199 = smul.addr %s2198, 8
        %s2200 = scalar_lea.vmem %s17, %s2199
        // Predicated region
        $region93: #{trend_vae_decoder_forward.1} parent=87 // pred_check
          %p2201 = pneg %p409
        $region94: #{trend_vae_decoder_forward.1} parent=87 // pred_check_branch
          %2203 = sbr.rel (%p2201) target = $region96
        $region95: #{trend_vae_decoder_forward.1} parent=87 // pred_region
          _
        $region96: #{trend_vae_decoder_forward.1} parent=87 // pred_fallthru
          _
      $region88: #{trend_vae_decoder_forward.1} parent=5 // pred_fallthru
        _
      %p2204 = scmp.le.s32.totalorder 2, %s24
      // Predicated region
      $region97: #{trend_vae_decoder_forward.1} parent=5 // pred_check
        %p2205 = pneg %p2204
      $region98: #{trend_vae_decoder_forward.1} parent=5 // pred_check_branch
        %2207 = sbr.rel (%p2205) target = $region100
      $region99: #{trend_vae_decoder_forward.1} parent=5 // pred_region
        %s2208 = ssub.s32 %s24, 2
        // Predicated region
        $region101: #{trend_vae_decoder_forward.1} parent=99 // pred_check
          %p2209 = pneg %p415
        $region102: #{trend_vae_decoder_forward.1} parent=99 // pred_check_branch
          %2211 = sbr.rel (%p2209) target = $region104
        $region103: #{trend_vae_decoder_forward.1} parent=99 // pred_region
          %p2212 = scmp.lt.s32.totalorder %s30, 1
          %s2213 = scalar_select %p2212, %s30, 1
          %s2214 = smul.addr %s2213, 2
          %s2215 = smul.addr %s2214, 8
          %s2216 = scalar_lea.vmem %s17, %s2215
        $region104: #{trend_vae_decoder_forward.1} parent=99 // pred_fallthru
          _
      $region100: #{trend_vae_decoder_forward.1} parent=5 // pred_fallthru
        _
    $region6: #{trend_vae_decoder_forward.1} parent=1 // loop_footer
      %s28 = sadd.s32 1, %s24
    $region7: #{trend_vae_decoder_forward.1} parent=1 // loop_footer_branch
      %23 = sbr.rel target = $region3
    $region8: #{trend_vae_decoder_forward.1} parent=1 // loop_exit
      _
    %2217 = vsyncpa [#allocation3], 1
    %s2218 = scalar_lea.sflag [#allocation3], 1
    %2219 = vsyncpa %s2218, 1

</llo_original>
